<compile_context>
chip_gen: v7x
topology: tpu7x:2x2x1
jax: 0.10.0
libtpu: 0.0.40
codegen_flags: <defaults>
</compile_context>

<pallas_src>
import functools

import jax
import jax.numpy as jnp
from jax.experimental import pallas as pl
from jax.experimental.pallas import tpu as pltpu

# torchvision transforms.Normalize constants from the module.
_CLIP_MEAN = (0.48145466, 0.4578275, 0.40821073)
_CLIP_STD = (0.26862954, 0.26130258, 0.27577711)
_LN_EPS = 1e-5


# ----------------------------- shared math helpers ---------------------------
def _layer_norm(x, g, b):
    mu = jnp.mean(x, axis=-1, keepdims=True)
    var = jnp.mean(jnp.square(x - mu), axis=-1, keepdims=True)
    return (x - mu) * jax.lax.rsqrt(var + _LN_EPS) * g + b


def _softmax(x):
    x = x - jnp.max(x, axis=-1, keepdims=True)
    e = jnp.exp(x)
    return e / jnp.sum(e, axis=-1, keepdims=True)


def _quick_gelu(x):  # CLIP uses QuickGELU: x * sigmoid(1.702 * x)
    return x * (1.0 / (1.0 + jnp.exp(-1.702 * x)))


# --------------------------------- kernels -----------------------------------
def _embed_kernel(patches_ref, scale_ref, bias_ref, wp_ref, cls_ref, pos_ref,
                  g_ref, b_ref, o_ref):
    # patches_ref: (1, n_patches, P)   scale/bias: (1, P)   wp: (P, width)
    # cls: (1, width)  pos: (seq, width)  g/b: (1, width)  o: (1, seq, width)
    x = patches_ref[0] * scale_ref[...] + bias_ref[...]        # fused Normalize
    pe = jnp.dot(x, wp_ref[...], preferred_element_type=jnp.float32)
    tok = jnp.concatenate([cls_ref[...], pe], axis=0) + pos_ref[...]
    o_ref[0] = _layer_norm(tok, g_ref[...], b_ref[...])        # ln_pre


def _block_kernel(x_ref, ln1g, ln1b, wqkv, bqkv, wo, bo, ln2g, ln2b,
                  wfc1, bfc1, wfc2, bfc2, o_ref, *, n_heads, head_dim):
    width = n_heads * head_dim
    x = x_ref[0]                                               # (seq, width)

    # --- multi-head self-attention ---
    h = _layer_norm(x, ln1g[...], ln1b[...])
    qkv = jnp.dot(h, wqkv[...], preferred_element_type=jnp.float32) + bqkv[...]
    q = qkv[:, :width]
    k = qkv[:, width:2 * width]
    v = qkv[:, 2 * width:]
    scale = 1.0 / (head_dim ** 0.5)
    heads_out = []
    for hh in range(n_heads):
        sl = slice(hh * head_dim, (hh + 1) * head_dim)
        s = jax.lax.dot_general(q[:, sl], k[:, sl],
                                (((1,), (1,)), ((), ())),
                                preferred_element_type=jnp.float32) * scale
        p = _softmax(s)
        heads_out.append(jnp.dot(p, v[:, sl],
                                 preferred_element_type=jnp.float32))
    attn = jnp.concatenate(heads_out, axis=-1)                 # (seq, width)
    x = x + jnp.dot(attn, wo[...], preferred_element_type=jnp.float32) + bo[...]

    # --- MLP ---
    h2 = _layer_norm(x, ln2g[...], ln2b[...])
    m = jnp.dot(h2, wfc1[...], preferred_element_type=jnp.float32) + bfc1[...]
    m = _quick_gelu(m)
    o_ref[0] = x + jnp.dot(m, wfc2[...],
                           preferred_element_type=jnp.float32) + bfc2[...]


def _head_kernel(x_ref, g_ref, b_ref, proj_ref, o_ref):
    cls_tok = x_ref[...][:, 0, :]                              # (B, width)
    h = _layer_norm(cls_tok, g_ref[...], b_ref[...])           # ln_post
    o_ref[...] = jnp.dot(h, proj_ref[...], preferred_element_type=jnp.float32)


# ------------------------------ pallas wrappers -------------------------------
def _embed_tokens(patches, scale, bias, w_patch, cls_emb, pos_emb, g, b):
    bsz, n_patches, pdim = patches.shape
    width = w_patch.shape[1]
    seq = n_patches + 1
    return pl.pallas_call(
        _embed_kernel,
        out_shape=jax.ShapeDtypeStruct((bsz, seq, width), jnp.float32),
        grid=(bsz,),
        in_specs=[
            pl.BlockSpec((1, n_patches, pdim), lambda i: (i, 0, 0)),
            pl.BlockSpec((1, pdim), lambda i: (0, 0)),
            pl.BlockSpec((1, pdim), lambda i: (0, 0)),
            pl.BlockSpec((pdim, width), lambda i: (0, 0)),
            pl.BlockSpec((1, width), lambda i: (0, 0)),
            pl.BlockSpec((seq, width), lambda i: (0, 0)),
            pl.BlockSpec((1, width), lambda i: (0, 0)),
            pl.BlockSpec((1, width), lambda i: (0, 0)),
        ],
        out_specs=pl.BlockSpec((1, seq, width), lambda i: (i, 0, 0)),
        compiler_params=pltpu.CompilerParams(dimension_semantics=("parallel",)),
    )(patches, scale, bias, w_patch, cls_emb, pos_emb, g, b)


def _transformer_block(x, blk, n_heads, head_dim):
    bsz, seq, width = x.shape
    params = [blk["ln1_g"], blk["ln1_b"], blk["w_qkv"], blk["b_qkv"],
              blk["w_o"], blk["b_o"], blk["ln2_g"], blk["ln2_b"],
              blk["w_fc1"], blk["b_fc1"], blk["w_fc2"], blk["b_fc2"]]
    kernel = functools.partial(_block_kernel, n_heads=n_heads, head_dim=head_dim)
    in_specs = [pl.BlockSpec((1, seq, width), lambda i: (i, 0, 0))]
    in_specs += [pl.BlockSpec(p.shape, lambda i: (0, 0)) for p in params]
    ce = pl.CostEstimate(
        flops=2 * bsz * seq * width * width * 12,
        transcendentals=bsz * seq * (n_heads * seq + 4 * width),
        bytes_accessed=4 * (2 * bsz * seq * width
                            + sum(int(p.size) for p in params)),
    )
    return pl.pallas_call(
        kernel,
        out_shape=jax.ShapeDtypeStruct((bsz, seq, width), jnp.float32),
        grid=(bsz,),
        in_specs=in_specs,
        out_specs=pl.BlockSpec((1, seq, width), lambda i: (i, 0, 0)),
        compiler_params=pltpu.CompilerParams(dimension_semantics=("parallel",)),
        cost_estimate=ce,
    )(x, *params)


def _ln_post_project(tokens, g, b, proj):
    bsz, seq, width = tokens.shape
    out_dim = proj.shape[1]
    return pl.pallas_call(
        _head_kernel,
        out_shape=jax.ShapeDtypeStruct((bsz, out_dim), jnp.float32),
        grid=(1,),
        in_specs=[
            pl.BlockSpec((bsz, seq, width), lambda i: (0, 0, 0)),
            pl.BlockSpec((1, width), lambda i: (0, 0)),
            pl.BlockSpec((1, width), lambda i: (0, 0)),
            pl.BlockSpec((width, out_dim), lambda i: (0, 0)),
        ],
        out_specs=pl.BlockSpec((bsz, out_dim), lambda i: (0, 0)),
    )(tokens, g, b, proj)


# --------------------------------- module ------------------------------------
def _patchify(rgb, patch):
    """NHWC image -> (B, n_patches, patch*patch*3), channel fastest (layout plumbing)."""
    b, h, w, c = rgb.shape
    gh, gw = h // patch, w // patch
    x = rgb.reshape(b, gh, patch, gw, patch, c)
    x = x.transpose(0, 1, 3, 2, 4, 5)
    return x.reshape(b, gh * gw, patch * patch * c)


class CLIPEncoderPallas:
    """JAX/Pallas port of CLIPEncoder.forward (default RGB branch)."""

    def __init__(self, image_size=64, patch_size=32, width=128, layers=2,
                 n_heads=4, embed_dim=128, key=None):
        if key is None:
            key = jax.random.PRNGKey(0)
        self.patch_size = patch_size
        self.width = width
        self.n_heads = n_heads
        self.head_dim = width // n_heads
        grid = image_size // patch_size
        self.n_patches = grid * grid
        self.seq = self.n_patches + 1
        pdim = patch_size * patch_size * 3

        ks = iter(jax.random.split(key, 4 + 4 * layers))

        def nrm(shape, scale):
            return jax.random.normal(next(ks), shape, jnp.float32) * scale

        self.w_patch = nrm((pdim, width), pdim ** -0.5)
        self.cls_emb = nrm((1, width), width ** -0.5)
        self.pos_emb = nrm((self.seq, width), width ** -0.5)
        self.proj = nrm((width, embed_dim), width ** -0.5)
        self.ln_pre = (jnp.ones((1, width), jnp.float32),
                       jnp.zeros((1, width), jnp.float32))
        self.ln_post = (jnp.ones((1, width), jnp.float32),
                        jnp.zeros((1, width), jnp.float32))
        self.blocks = []
        for _ in range(layers):
            self.blocks.append(dict(
                ln1_g=jnp.ones((1, width), jnp.float32),
                ln1_b=jnp.zeros((1, width), jnp.float32),
                w_qkv=nrm((width, 3 * width), width ** -0.5),
                b_qkv=jnp.zeros((1, 3 * width), jnp.float32),
                w_o=nrm((width, width), width ** -0.5),
                b_o=jnp.zeros((1, width), jnp.float32),
                ln2_g=jnp.ones((1, width), jnp.float32),
                ln2_b=jnp.zeros((1, width), jnp.float32),
                w_fc1=nrm((width, 4 * width), width ** -0.5),
                b_fc1=jnp.zeros((1, 4 * width), jnp.float32),
                w_fc2=nrm((4 * width, width), (4 * width) ** -0.5),
                b_fc2=jnp.zeros((1, width), jnp.float32),
            ))
        # rgb_transform Normalize folded to x*scale + bias on the
        # (ph, pw, C)-flattened patch layout (channel is the fastest dim).
        mean = jnp.asarray(_CLIP_MEAN, jnp.float32)
        std = jnp.asarray(_CLIP_STD, jnp.float32)
        self.norm_scale = jnp.tile(1.0 / std, patch_size * patch_size)[None, :]
        self.norm_bias = jnp.tile(-mean / std, patch_size * patch_size)[None, :]

    def __call__(self, observations, obs_land=None, seg_mask=None):
        if obs_land is not None or seg_mask is not None:
            # TODO(synk): obs_land text-similarity and seg_mask branches of the
            # forward are not ported (need CLIP text features / segmentation).
            raise NotImplementedError("only the default RGB branch is ported")
        rgb = observations["rgb"].astype(jnp.float32)          # (B, H, W, 3)
        patches = _patchify(rgb, self.patch_size)              # permute + im2col
        tokens = _embed_tokens(patches, self.norm_scale, self.norm_bias,
                               self.w_patch, self.cls_emb, self.pos_emb,
                               *self.ln_pre)
        for blk in self.blocks:
            tokens = _transformer_block(tokens, blk, self.n_heads, self.head_dim)
        out = _ln_post_project(tokens, *self.ln_post, self.proj)
        return out.astype(jnp.float32)                         # output.float()


# ---------------------------- pure-JAX reference ------------------------------
def _reference_forward(enc, rgb):
    hp = "highest"
    patches = _patchify(rgb.astype(jnp.float32), enc.patch_size)
    x = patches * enc.norm_scale + enc.norm_bias
    pe = jnp.einsum("bnp,pw->bnw", x, enc.w_patch, precision=hp)
    cls = jnp.broadcast_to(enc.cls_emb[None], (rgb.shape[0], 1, enc.width))
    tok = jnp.concatenate([cls, pe], axis=1) + enc.pos_emb[None]
    tok = _layer_norm(tok, *enc.ln_pre)
    hd, nh = enc.head_dim, enc.n_heads
    for blk in enc.blocks:
        h = _layer_norm(tok, blk["ln1_g"], blk["ln1_b"])
        qkv = jnp.einsum("bsw,wk->bsk", h, blk["w_qkv"], precision=hp) + blk["b_qkv"]
        q, k, v = jnp.split(qkv, 3, axis=-1)
        B, S, W = q.shape
        qh = q.reshape(B, S, nh, hd).transpose(0, 2, 1, 3)
        kh = k.reshape(B, S, nh, hd).transpose(0, 2, 1, 3)
        vh = v.reshape(B, S, nh, hd).transpose(0, 2, 1, 3)
        s = jnp.einsum("bhqd,bhkd->bhqk", qh, kh, precision=hp) * (1.0 / hd ** 0.5)
        p = _softmax(s)
        o = jnp.einsum("bhqk,bhkd->bhqd", p, vh, precision=hp)
        o = o.transpose(0, 2, 1, 3).reshape(B, S, W)
        tok = tok + jnp.einsum("bsw,wo->bso", o, blk["w_o"], precision=hp) + blk["b_o"]
        h2 = _layer_norm(tok, blk["ln2_g"], blk["ln2_b"])
        m = jnp.einsum("bsw,wf->bsf", h2, blk["w_fc1"], precision=hp) + blk["b_fc1"]
        m = _quick_gelu(m)
        tok = tok + jnp.einsum("bsf,fw->bsw", m, blk["w_fc2"], precision=hp) + blk["b_fc2"]
    clst = _layer_norm(tok[:, 0, :], *enc.ln_post)
    return jnp.dot(clst, enc.proj, precision=hp)


if __name__ == "__main__":
    key = jax.random.PRNGKey(0)
    k_img, k_model = jax.random.split(key)
    B, H, W = 2, 64, 64
    rgb = jax.random.uniform(k_img, (B, H, W, 3), jnp.float32)   # RGB in [0, 1]

    enc = CLIPEncoderPallas(image_size=H, patch_size=32, width=128, layers=2,
                            n_heads=4, embed_dim=128, key=k_model)
    out = enc({"rgb": rgb})
    out = jax.block_until_ready(out)

    ref = _reference_forward(enc, rgb)
    assert out.shape == (B, 128), out.shape
    assert out.dtype == jnp.float32
    max_err = float(jnp.max(jnp.abs(out - ref)))
    assert jnp.allclose(out, ref, rtol=2e-3, atol=2e-3), f"max_err={max_err}"
    print("KERNEL_OK")
</pallas_src>

<mosaic_0001>
module attributes {stable_mosaic.version = 11 : i64} {
  func.func @_embed_kernel(%arg0: i32, %arg1: memref<1x4x3072xf32, #tpu.memory_space<vmem>>, %arg2: memref<1x3072xf32, #tpu.memory_space<vmem>>, %arg3: memref<1x3072xf32, #tpu.memory_space<vmem>>, %arg4: memref<3072x128xf32, #tpu.memory_space<vmem>>, %arg5: memref<1x128xf32, #tpu.memory_space<vmem>>, %arg6: memref<5x128xf32, #tpu.memory_space<vmem>>, %arg7: memref<1x128xf32, #tpu.memory_space<vmem>>, %arg8: memref<1x128xf32, #tpu.memory_space<vmem>>, %arg9: memref<1x5x128xf32, #tpu.memory_space<vmem>>) attributes {dimension_semantics = [#tpu.dimension_semantics<parallel>], iteration_bounds = array<i64: 2>, scalar_prefetch = 0 : i64, scratch_operands = 0 : i64, tpu.core_type = #tpu.core_type<tc>, window_params = [{transform_indices = @transform_0, window_bounds = array<i64: 1, 4, 3072>}, {pipeline_mode = #tpu.pipeline_mode<synchronous>, transform_indices = @transform_1, window_bounds = array<i64: 1, 3072>}, {pipeline_mode = #tpu.pipeline_mode<synchronous>, transform_indices = @transform_2, window_bounds = array<i64: 1, 3072>}, {pipeline_mode = #tpu.pipeline_mode<synchronous>, transform_indices = @transform_3, window_bounds = array<i64: 3072, 128>}, {pipeline_mode = #tpu.pipeline_mode<synchronous>, transform_indices = @transform_4, window_bounds = array<i64: 1, 128>}, {pipeline_mode = #tpu.pipeline_mode<synchronous>, transform_indices = @transform_5, window_bounds = array<i64: 5, 128>}, {pipeline_mode = #tpu.pipeline_mode<synchronous>, transform_indices = @transform_6, window_bounds = array<i64: 1, 128>}, {pipeline_mode = #tpu.pipeline_mode<synchronous>, transform_indices = @transform_7, window_bounds = array<i64: 1, 128>}, {transform_indices = @transform_8, window_bounds = array<i64: 1, 5, 128>}]} {
    %c0 = arith.constant 0 : index
    %c0_0 = arith.constant 0 : index
    %c0_1 = arith.constant 0 : index
    %0 = vector.load %arg1[%c0, %c0_0, %c0_1] : memref<1x4x3072xf32, #tpu.memory_space<vmem>>, vector<1x4x3072xf32>
    %1 = vector.shape_cast %0 : vector<1x4x3072xf32> to vector<4x3072xf32>
    %c0_2 = arith.constant 0 : index
    %c0_3 = arith.constant 0 : index
    %2 = vector.load %arg2[%c0_2, %c0_3] : memref<1x3072xf32, #tpu.memory_space<vmem>>, vector<1x3072xf32>
    %3 = vector.broadcast %2 : vector<1x3072xf32> to vector<4x3072xf32>
    %4 = arith.mulf %1, %3 : vector<4x3072xf32>
    %c0_4 = arith.constant 0 : index
    %c0_5 = arith.constant 0 : index
    %5 = vector.load %arg3[%c0_4, %c0_5] : memref<1x3072xf32, #tpu.memory_space<vmem>>, vector<1x3072xf32>
    %6 = vector.broadcast %5 : vector<1x3072xf32> to vector<4x3072xf32>
    %7 = arith.addf %4, %6 : vector<4x3072xf32>
    %c0_6 = arith.constant 0 : index
    %c0_7 = arith.constant 0 : index
    %8 = vector.load %arg4[%c0_6, %c0_7] : memref<3072x128xf32, #tpu.memory_space<vmem>>, vector<3072x128xf32>
    %cst = arith.constant dense<0.000000e+00> : vector<4x128xf32>
    %9 = tpu.matmul %7, %8, %cst {dimension_numbers = #tpu.dot_dimension_numbers<[1], [0], [0], [1], [0, 0, 1, 1], [], []>} : vector<4x3072xf32>, vector<3072x128xf32>, vector<4x128xf32> -> vector<4x128xf32>
    %c0_8 = arith.constant 0 : index
    %c0_9 = arith.constant 0 : index
    %10 = vector.load %arg5[%c0_8, %c0_9] : memref<1x128xf32, #tpu.memory_space<vmem>>, vector<1x128xf32>
    %11 = tpu.concatenate %10, %9 in 0 : vector<1x128xf32>, vector<4x128xf32> -> vector<5x128xf32>
    %c0_10 = arith.constant 0 : index
    %c0_11 = arith.constant 0 : index
    %12 = vector.load %arg6[%c0_10, %c0_11] : memref<5x128xf32, #tpu.memory_space<vmem>>, vector<5x128xf32>
    %13 = arith.addf %11, %12 : vector<5x128xf32>
    %c0_12 = arith.constant 0 : index
    %c0_13 = arith.constant 0 : index
    %14 = vector.load %arg7[%c0_12, %c0_13] : memref<1x128xf32, #tpu.memory_space<vmem>>, vector<1x128xf32>
    %c0_14 = arith.constant 0 : index
    %c0_15 = arith.constant 0 : index
    %15 = vector.load %arg8[%c0_14, %c0_15] : memref<1x128xf32, #tpu.memory_space<vmem>>, vector<1x128xf32>
    %cst_16 = arith.constant dense<0.000000e+00> : vector<5xf32>
    %16 = vector.multi_reduction <add>, %13, %cst_16 [1] : vector<5x128xf32> to vector<5xf32>
    %17 = vector.shape_cast %16 : vector<5xf32> to vector<5x1xf32>
    %cst_17 = arith.constant 1.280000e+02 : f32
    %18 = vector.broadcast %cst_17 : f32 to vector<5x1xf32>
    %19 = arith.divf %17, %18 : vector<5x1xf32>
    %20 = vector.broadcast %19 : vector<5x1xf32> to vector<5x128xf32>
    %21 = arith.subf %13, %20 : vector<5x128xf32>
    %22 = arith.mulf %21, %21 : vector<5x128xf32>
    %cst_18 = arith.constant dense<0.000000e+00> : vector<5xf32>
    %23 = vector.multi_reduction <add>, %22, %cst_18 [1] : vector<5x128xf32> to vector<5xf32>
    %24 = vector.shape_cast %23 : vector<5xf32> to vector<5x1xf32>
    %cst_19 = arith.constant 1.280000e+02 : f32
    %25 = vector.broadcast %cst_19 : f32 to vector<5x1xf32>
    %26 = arith.divf %24, %25 : vector<5x1xf32>
    %27 = vector.broadcast %19 : vector<5x1xf32> to vector<5x128xf32>
    %28 = arith.subf %13, %27 : vector<5x128xf32>
    %cst_20 = arith.constant 9.99999974E-6 : f32
    %29 = vector.broadcast %cst_20 : f32 to vector<5x1xf32>
    %30 = arith.addf %26, %29 : vector<5x1xf32>
    %31 = math.rsqrt %30 : vector<5x1xf32>
    %32 = vector.broadcast %31 : vector<5x1xf32> to vector<5x128xf32>
    %33 = arith.mulf %28, %32 : vector<5x128xf32>
    %34 = vector.broadcast %14 : vector<1x128xf32> to vector<5x128xf32>
    %35 = arith.mulf %33, %34 : vector<5x128xf32>
    %36 = vector.broadcast %15 : vector<1x128xf32> to vector<5x128xf32>
    %37 = arith.addf %35, %36 : vector<5x128xf32>
    %c0_21 = arith.constant 0 : index
    %c0_22 = arith.constant 0 : index
    %c0_23 = arith.constant 0 : index
    %38 = vector.load %arg9[%c0_21, %c0_22, %c0_23] : memref<1x5x128xf32, #tpu.memory_space<vmem>>, vector<1x5x128xf32>
    %39 = vector.shape_cast %38 : vector<1x5x128xf32> to vector<5x128xf32>
    %40 = vector.shape_cast %37 : vector<5x128xf32> to vector<1x5x128xf32>
    tpu.vector_store %arg9[%c0_21, %c0_22, %c0_23], %40 {strides = array<i32>} : memref<1x5x128xf32, #tpu.memory_space<vmem>>, vector<1x5x128xf32>,
    return
  }
  func.func @transform_0(%arg0: i32) -> (i32, i32, i32) {
    %c0_i32 = arith.constant 0 : i32
    %c0_i32_0 = arith.constant 0 : i32
    %c0_i32_1 = arith.constant 0 : i32
    return %arg0, %c0_i32, %c0_i32_0 : i32, i32, i32
  }
  func.func @transform_1(%arg0: i32) -> (i32, i32) {
    %c0_i32 = arith.constant 0 : i32
    %c0_i32_0 = arith.constant 0 : i32
    %c0_i32_1 = arith.constant 0 : i32
    return %c0_i32, %c0_i32_0 : i32, i32
  }
  func.func @transform_2(%arg0: i32) -> (i32, i32) {
    %c0_i32 = arith.constant 0 : i32
    %c0_i32_0 = arith.constant 0 : i32
    %c0_i32_1 = arith.constant 0 : i32
    return %c0_i32, %c0_i32_0 : i32, i32
  }
  func.func @transform_3(%arg0: i32) -> (i32, i32) {
    %c0_i32 = arith.constant 0 : i32
    %c0_i32_0 = arith.constant 0 : i32
    %c0_i32_1 = arith.constant 0 : i32
    return %c0_i32, %c0_i32_0 : i32, i32
  }
  func.func @transform_4(%arg0: i32) -> (i32, i32) {
    %c0_i32 = arith.constant 0 : i32
    %c0_i32_0 = arith.constant 0 : i32
    %c0_i32_1 = arith.constant 0 : i32
    return %c0_i32, %c0_i32_0 : i32, i32
  }
  func.func @transform_5(%arg0: i32) -> (i32, i32) {
    %c0_i32 = arith.constant 0 : i32
    %c0_i32_0 = arith.constant 0 : i32
    %c0_i32_1 = arith.constant 0 : i32
    return %c0_i32, %c0_i32_0 : i32, i32
  }
  func.func @transform_6(%arg0: i32) -> (i32, i32) {
    %c0_i32 = arith.constant 0 : i32
    %c0_i32_0 = arith.constant 0 : i32
    %c0_i32_1 = arith.constant 0 : i32
    return %c0_i32, %c0_i32_0 : i32, i32
  }
  func.func @transform_7(%arg0: i32) -> (i32, i32) {
    %c0_i32 = arith.constant 0 : i32
    %c0_i32_0 = arith.constant 0 : i32
    %c0_i32_1 = arith.constant 0 : i32
    return %c0_i32, %c0_i32_0 : i32, i32
  }
  func.func @transform_8(%arg0: i32) -> (i32, i32, i32) {
    %c0_i32 = arith.constant 0 : i32
    %c0_i32_0 = arith.constant 0 : i32
    %c0_i32_1 = arith.constant 0 : i32
    return %arg0, %c0_i32, %c0_i32_0 : i32, i32, i32
  }
}

</mosaic_0001>

<llo_original>
// kernel: tpu_custom_call.1
$region0: #{tpu_custom_call.1}
  #allocation0 [shape = 'u32[]', space=smem, size = 0x4, offset = 0x4, fixed_abs, tag = 'smem constant byte address 0x4 - core index']
  #allocation1 [shape = 'u32[144,128]{1,0:T(1,128)}', space=vmem, size = 0x12000, scoped, tag = 'internal scratch']
  %s0 = inlined_call_operand.hbm [shape: f32[2,4,3072], index: 0, kind: input, shape index: {}]
  %s1 = inlined_call_operand.hbm [shape: f32[1,3072], index: 1, kind: input, shape index: {}]
  %s2 = inlined_call_operand.hbm [shape: f32[1,3072], index: 2, kind: input, shape index: {}]
  %s3 = inlined_call_operand.hbm [shape: f32[3072,128], index: 3, kind: input, shape index: {}]
  %s4 = inlined_call_operand.hbm [shape: f32[1,128], index: 4, kind: input, shape index: {}]
  %s5 = inlined_call_operand.hbm [shape: f32[5,128], index: 5, kind: input, shape index: {}]
  %s6 = inlined_call_operand.hbm [shape: f32[1,128], index: 6, kind: input, shape index: {}]
  %s7 = inlined_call_operand.hbm [shape: f32[1,128], index: 7, kind: input, shape index: {}]
  %s8 = inlined_call_operand.vmem [shape: f32[2,5,128], index: 8, kind: output, shape index: {}]
  %s9 = sld [smem:[#allocation0]]
  $region97: #{tpu_custom_call.1} parent=0
    _
  %s11 = ssub.s32 1, %s9
  %s12 = scalar_select 0, %s11, %s9
  $region1: #{tpu_custom_call.1} parent=0
    #allocation2 [shape = 'u8[98304]{0}', space=vmem, size = 0x18000, scoped, tag = 'input window, operand 0']
    #allocation3 [shape = 's32[2]{0}', space=sflag, size = 0x8, scoped, tag = 'scoped memory for tpu_custom_call.1']
    #allocation4 [shape = 'u8[12288]{0}', space=vmem, size = 0x3000, scoped, tag = 'input window, operand 1, single buffered']
    #allocation5 [shape = 's32[1]{0}', space=sflag, size = 0x4, scoped, tag = 'scoped memory for tpu_custom_call.1']
    #allocation6 [shape = 'u8[12288]{0}', space=vmem, size = 0x3000, scoped, tag = 'input window, operand 2, single buffered']
    #allocation7 [shape = 'u8[1572864]{0}', space=vmem, size = 0x180000, scoped, tag = 'input window, operand 3, single buffered']
    #allocation8 [shape = 's32[1]{0}', space=sflag, size = 0x4, scoped, tag = 'scoped memory for tpu_custom_call.1']
    #allocation9 [shape = 'u8[512]{0}', space=vmem, size = 0x400, scoped, tag = 'input window, operand 4, single buffered']
    #allocation10 [shape = 'u8[4096]{0}', space=vmem, size = 0x1000, scoped, tag = 'input window, operand 5, single buffered']
    #allocation11 [shape = 's32[1]{0}', space=sflag, size = 0x4, scoped, tag = 'scoped memory for tpu_custom_call.1']
    #allocation12 [shape = 'u8[512]{0}', space=vmem, size = 0x400, scoped, tag = 'input window, operand 6, single buffered']
    #allocation13 [shape = 'u8[512]{0}', space=vmem, size = 0x400, scoped, tag = 'input window, operand 7, single buffered']
    #allocation14 [shape = 's32[1]{0}', space=sflag, size = 0x4, scoped, tag = 'scoped memory for tpu_custom_call.1']
    %13 = vsyncpa [#allocation3], 0
    %s14 = scalar_lea.sflag [#allocation3], 1
    %15 = vsyncpa %s14, 0
    %16 = vsyncpa [#allocation5], 0
    %17 = vsyncpa [#allocation8], 0
    %18 = vsyncpa [#allocation11], 0
    %19 = vsyncpa [#allocation14], 0
    loop: start=0, step=1, limit=4
    $region2: #{tpu_custom_call.1} parent=1 // loop_pre_header
      _
    $region3: #{tpu_custom_call.1} parent=1 // loop_header
      %s21 = sphi 0, %s25
      %p22 = scmp.ge.s32.totalorder %s21, 4
      %s31 = sphi 0, %s33
      %s34 = sphi 0, %s31
      %s35 = sphi 0, %s34
      %s51 = sphi 0, %s35
      %s55 = sphi 0, %s55
      %s57 = sphi 0, %s55
      %s58 = sphi 0, %s57
      %s72 = sphi 0, %s58
      %s76 = sphi 0, %s76
      %s78 = sphi 0, %s76
      %s79 = sphi 0, %s78
      %s93 = sphi 0, %s79
      %s97 = sphi 0, %s97
      %s99 = sphi 0, %s97
      %s100 = sphi 0, %s99
      %s114 = sphi 0, %s100
      %s118 = sphi 0, %s118
      %s120 = sphi 0, %s118
      %s121 = sphi 0, %s120
      %s135 = sphi 0, %s121
      %s139 = sphi 0, %s139
      %s141 = sphi 0, %s139
      %s142 = sphi 0, %s141
      %s156 = sphi 0, %s142
      %s160 = sphi 0, %s160
      %s162 = sphi 0, %s160
      %s163 = sphi 0, %s162
      %s177 = sphi 0, %s163
      %s181 = sphi 0, %s181
      %s183 = sphi 0, %s181
      %s184 = sphi 0, %s183
      %s198 = sphi 0, %s184
      %s204 = sphi 0, %s206
      %s207 = sphi 0, %s204
      %s208 = sphi 0, %s207
      %s224 = sphi 0, %s208
    $region4: #{tpu_custom_call.1} parent=1 // loop_header_branch
      %24 = sbr.rel (%p22) target = $region8
    $region5: #{tpu_custom_call.1} parent=1 // loop_body
      %s26 = ssub.s32 %s21, 1
      %s27 = ssub.s32 %s21, 2
      %s28 = sadd.s32 %s21, 1
      %s29 = ssub.s32 %s21, %s28
      %p30 = scmp.eq.s32.totalorder %s29, 0
      %s32 = sadd.s32 %s31, 1
      %s33 = scalar_select %p30, %s31, %s32
      %p36 = pneg %p30
      %p37 = scmp.eq.s32.totalorder %s21, 1
      %p38 = por %p36, %p37
      %p39 = scmp.ne.s32.totalorder %s31, %s34
      %p40 = scmp.eq.s32.totalorder %s21, 0
      %p41 = por %p39, %p40
      %p42 = scmp.ne.s32.totalorder %s31, %s34
      %p43 = scmp.eq.s32.totalorder %s26, 1
      %p44 = por %p42, %p43
      %p45 = scmp.ne.s32.totalorder %s34, %s35
      %p46 = scmp.eq.s32.totalorder %s26, 0
      %p47 = por %p45, %p46
      %p48 = scmp.ne.s32.totalorder %s34, %s35
      %p49 = scmp.eq.s32.totalorder %s27, 1
      %p50 = por %p48, %p49
      %p52 = scmp.ne.s32.totalorder %s35, %s51
      %p53 = scmp.eq.s32.totalorder %s27, 0
      %p54 = por %p52, %p53
      %s56 = sadd.s32 %s55, 1
      %p59 = scmp.eq.s32.totalorder %s21, 1
      %p60 = scmp.ne.s32.totalorder %s55, %s57
      %p61 = scmp.eq.s32.totalorder %s21, 0
      %p62 = por %p60, %p61
      %p63 = scmp.ne.s32.totalorder %s55, %s57
      %p64 = scmp.eq.s32.totalorder %s26, 1
      %p65 = por %p63, %p64
      %p66 = scmp.ne.s32.totalorder %s57, %s58
      %p67 = scmp.eq.s32.totalorder %s26, 0
      %p68 = por %p66, %p67
      %p69 = scmp.ne.s32.totalorder %s57, %s58
      %p70 = scmp.eq.s32.totalorder %s27, 1
      %p71 = por %p69, %p70
      %p73 = scmp.ne.s32.totalorder %s58, %s72
      %p74 = scmp.eq.s32.totalorder %s27, 0
      %p75 = por %p73, %p74
      %s77 = sadd.s32 %s76, 1
      %p80 = scmp.eq.s32.totalorder %s21, 1
      %p81 = scmp.ne.s32.totalorder %s76, %s78
      %p82 = scmp.eq.s32.totalorder %s21, 0
      %p83 = por %p81, %p82
      %p84 = scmp.ne.s32.totalorder %s76, %s78
      %p85 = scmp.eq.s32.totalorder %s26, 1
      %p86 = por %p84, %p85
      %p87 = scmp.ne.s32.totalorder %s78, %s79
      %p88 = scmp.eq.s32.totalorder %s26, 0
      %p89 = por %p87, %p88
      %p90 = scmp.ne.s32.totalorder %s78, %s79
      %p91 = scmp.eq.s32.totalorder %s27, 1
      %p92 = por %p90, %p91
      %p94 = scmp.ne.s32.totalorder %s79, %s93
      %p95 = scmp.eq.s32.totalorder %s27, 0
      %p96 = por %p94, %p95
      %s98 = sadd.s32 %s97, 1
      %p101 = scmp.eq.s32.totalorder %s21, 1
      %p102 = scmp.ne.s32.totalorder %s97, %s99
      %p103 = scmp.eq.s32.totalorder %s21, 0
      %p104 = por %p102, %p103
      %p105 = scmp.ne.s32.totalorder %s97, %s99
      %p106 = scmp.eq.s32.totalorder %s26, 1
      %p107 = por %p105, %p106
      %p108 = scmp.ne.s32.totalorder %s99, %s100
      %p109 = scmp.eq.s32.totalorder %s26, 0
      %p110 = por %p108, %p109
      %p111 = scmp.ne.s32.totalorder %s99, %s100
      %p112 = scmp.eq.s32.totalorder %s27, 1
      %p113 = por %p111, %p112
      %p115 = scmp.ne.s32.totalorder %s100, %s114
      %p116 = scmp.eq.s32.totalorder %s27, 0
      %p117 = por %p115, %p116
      %s119 = sadd.s32 %s118, 1
      %p122 = scmp.eq.s32.totalorder %s21, 1
      %p123 = scmp.ne.s32.totalorder %s118, %s120
      %p124 = scmp.eq.s32.totalorder %s21, 0
      %p125 = por %p123, %p124
      %p126 = scmp.ne.s32.totalorder %s118, %s120
      %p127 = scmp.eq.s32.totalorder %s26, 1
      %p128 = por %p126, %p127
      %p129 = scmp.ne.s32.totalorder %s120, %s121
      %p130 = scmp.eq.s32.totalorder %s26, 0
      %p131 = por %p129, %p130
      %p132 = scmp.ne.s32.totalorder %s120, %s121
      %p133 = scmp.eq.s32.totalorder %s27, 1
      %p134 = por %p132, %p133
      %p136 = scmp.ne.s32.totalorder %s121, %s135
      %p137 = scmp.eq.s32.totalorder %s27, 0
      %p138 = por %p136, %p137
      %s140 = sadd.s32 %s139, 1
      %p143 = scmp.eq.s32.totalorder %s21, 1
      %p144 = scmp.ne.s32.totalorder %s139, %s141
      %p145 = scmp.eq.s32.totalorder %s21, 0
      %p146 = por %p144, %p145
      %p147 = scmp.ne.s32.totalorder %s139, %s141
      %p148 = scmp.eq.s32.totalorder %s26, 1
      %p149 = por %p147, %p148
      %p150 = scmp.ne.s32.totalorder %s141, %s142
      %p151 = scmp.eq.s32.totalorder %s26, 0
      %p152 = por %p150, %p151
      %p153 = scmp.ne.s32.totalorder %s141, %s142
      %p154 = scmp.eq.s32.totalorder %s27, 1
      %p155 = por %p153, %p154
      %p157 = scmp.ne.s32.totalorder %s142, %s156
      %p158 = scmp.eq.s32.totalorder %s27, 0
      %p159 = por %p157, %p158
      %s161 = sadd.s32 %s160, 1
      %p164 = scmp.eq.s32.totalorder %s21, 1
      %p165 = scmp.ne.s32.totalorder %s160, %s162
      %p166 = scmp.eq.s32.totalorder %s21, 0
      %p167 = por %p165, %p166
      %p168 = scmp.ne.s32.totalorder %s160, %s162
      %p169 = scmp.eq.s32.totalorder %s26, 1
      %p170 = por %p168, %p169
      %p171 = scmp.ne.s32.totalorder %s162, %s163
      %p172 = scmp.eq.s32.totalorder %s26, 0
      %p173 = por %p171, %p172
      %p174 = scmp.ne.s32.totalorder %s162, %s163
      %p175 = scmp.eq.s32.totalorder %s27, 1
      %p176 = por %p174, %p175
      %p178 = scmp.ne.s32.totalorder %s163, %s177
      %p179 = scmp.eq.s32.totalorder %s27, 0
      %p180 = por %p178, %p179
      %s182 = sadd.s32 %s181, 1
      %p185 = scmp.eq.s32.totalorder %s21, 1
      %p186 = scmp.ne.s32.totalorder %s181, %s183
      %p187 = scmp.eq.s32.totalorder %s21, 0
      %p188 = por %p186, %p187
      %p189 = scmp.ne.s32.totalorder %s181, %s183
      %p190 = scmp.eq.s32.totalorder %s26, 1
      %p191 = por %p189, %p190
      %p192 = scmp.ne.s32.totalorder %s183, %s184
      %p193 = scmp.eq.s32.totalorder %s26, 0
      %p194 = por %p192, %p193
      %p195 = scmp.ne.s32.totalorder %s183, %s184
      %p196 = scmp.eq.s32.totalorder %s27, 1
      %p197 = por %p195, %p196
      %p199 = scmp.ne.s32.totalorder %s184, %s198
      %p200 = scmp.eq.s32.totalorder %s27, 0
      %p201 = por %p199, %p200
      %s202 = ssub.s32 %s21, %s28
      %p203 = scmp.eq.s32.totalorder %s202, 0
      %s205 = sadd.s32 %s204, 1
      %s206 = scalar_select %p203, %s204, %s205
      %p209 = pneg %p203
      %p210 = scmp.eq.s32.totalorder %s21, 1
      %p211 = por %p209, %p210
      %p212 = scmp.ne.s32.totalorder %s204, %s207
      %p213 = scmp.eq.s32.totalorder %s21, 0
      %p214 = por %p212, %p213
      %p215 = scmp.ne.s32.totalorder %s204, %s207
      %p216 = scmp.eq.s32.totalorder %s26, 1
      %p217 = por %p215, %p216
      %p218 = scmp.ne.s32.totalorder %s207, %s208
      %p219 = scmp.eq.s32.totalorder %s26, 0
      %p220 = por %p218, %p219
      %p221 = scmp.ne.s32.totalorder %s207, %s208
      %p222 = scmp.eq.s32.totalorder %s27, 1
      %p223 = por %p221, %p222
      %p225 = scmp.ne.s32.totalorder %s208, %s224
      %p226 = scmp.eq.s32.totalorder %s27, 0
      %p227 = por %p225, %p226
      %p228 = scmp.le.s32.totalorder 1, %s21
      %p229 = scmp.lt.s32.totalorder %s21, 3
      %p230 = pnand %p228, %p229
      %p231 = pneg %p230
      // Predicated region
      $region9: #{tpu_custom_call.1} parent=5 // pred_check
        _
      $region10: #{tpu_custom_call.1} parent=5 // pred_check_branch
        %233 = sbr.rel (%p230) target = $region12
      $region11: #{tpu_custom_call.1} parent=5 // pred_region
        %s234 = ssub.s32 %s21, 1
        // Predicated region
        $region13: #{tpu_custom_call.1} parent=11 // pred_check
          %p235 = pneg %p68
        $region14: #{tpu_custom_call.1} parent=11 // pred_check_branch
          %237 = sbr.rel (%p235) target = $region16
        $region15: #{tpu_custom_call.1} parent=11 // pred_region
          %s239 = ssub.s32 384, 384
          %240 = vsyncadd [#allocation5], %s239
          %s242 = sshll.u32 [#allocation4], 4
          %s243 = int_to_ptr.vmem [resolvable:$true] %s242
          %245 = dma.hbm_to_vmem [thread:$0]  %s1, 384, %s243, [#allocation5]
        $region16: #{tpu_custom_call.1} parent=11 // pred_fallthru
          _
        // Predicated region
        $region17: #{tpu_custom_call.1} parent=11 // pred_check
          %p246 = pneg %p89
        $region18: #{tpu_custom_call.1} parent=11 // pred_check_branch
          %248 = sbr.rel (%p246) target = $region20
        $region19: #{tpu_custom_call.1} parent=11 // pred_region
          %s250 = ssub.s32 384, 384
          %251 = vsyncadd [#allocation5], %s250
          %s253 = sshll.u32 [#allocation6], 4
          %s254 = int_to_ptr.vmem [resolvable:$true] %s253
          %256 = dma.hbm_to_vmem [thread:$0]  %s2, 384, %s254, [#allocation5]
        $region20: #{tpu_custom_call.1} parent=11 // pred_fallthru
          _
        // Predicated region
        $region21: #{tpu_custom_call.1} parent=11 // pred_check
          %p257 = pneg %p110
        $region22: #{tpu_custom_call.1} parent=11 // pred_check_branch
          %259 = sbr.rel (%p257) target = $region24
        $region23: #{tpu_custom_call.1} parent=11 // pred_region
          %s261 = ssub.s32 49152, 49152
          %262 = vsyncadd [#allocation8], %s261
          %s263 = sshll.u32 [#allocation7], 4
          %s264 = int_to_ptr.vmem [resolvable:$true] %s263
          %269 = dma.hbm_to_vmem [thread:$0]  %s3, 49152, %s264, [#allocation8], 128, 128, 8
        $region24: #{tpu_custom_call.1} parent=11 // pred_fallthru
          _
        // Predicated region
        $region25: #{tpu_custom_call.1} parent=11 // pred_check
          %p270 = pneg %p131
        $region26: #{tpu_custom_call.1} parent=11 // pred_check_branch
          %272 = sbr.rel (%p270) target = $region28
        $region27: #{tpu_custom_call.1} parent=11 // pred_region
          %s274 = ssub.s32 16, 16
          %275 = vsyncadd [#allocation8], %s274
          %s277 = sshll.u32 [#allocation9], 4
          %s278 = int_to_ptr.vmem [resolvable:$true] %s277
          %280 = dma.hbm_to_vmem [thread:$0]  %s4, 16, %s278, [#allocation8]
        $region28: #{tpu_custom_call.1} parent=11 // pred_fallthru
          _
        // Predicated region
        $region29: #{tpu_custom_call.1} parent=11 // pred_check
          %p281 = pneg %p152
        $region30: #{tpu_custom_call.1} parent=11 // pred_check_branch
          %283 = sbr.rel (%p281) target = $region32
        $region31: #{tpu_custom_call.1} parent=11 // pred_region
          %s285 = ssub.s32 128, 128
          %286 = vsyncadd [#allocation11], %s285
          %s288 = sshll.u32 [#allocation10], 4
          %s289 = int_to_ptr.vmem [resolvable:$true] %s288
          %291 = dma.hbm_to_vmem [thread:$0]  %s5, 128, %s289, [#allocation11]
        $region32: #{tpu_custom_call.1} parent=11 // pred_fallthru
          _
        // Predicated region
        $region33: #{tpu_custom_call.1} parent=11 // pred_check
          %p292 = pneg %p173
        $region34: #{tpu_custom_call.1} parent=11 // pred_check_branch
          %294 = sbr.rel (%p292) target = $region36
        $region35: #{tpu_custom_call.1} parent=11 // pred_region
          %s296 = ssub.s32 16, 16
          %297 = vsyncadd [#allocation11], %s296
          %s299 = sshll.u32 [#allocation12], 4
          %s300 = int_to_ptr.vmem [resolvable:$true] %s299
          %302 = dma.hbm_to_vmem [thread:$0]  %s6, 16, %s300, [#allocation11]
        $region36: #{tpu_custom_call.1} parent=11 // pred_fallthru
          _
        // Predicated region
        $region37: #{tpu_custom_call.1} parent=11 // pred_check
          %p303 = pneg %p194
        $region38: #{tpu_custom_call.1} parent=11 // pred_check_branch
          %305 = sbr.rel (%p303) target = $region40
        $region39: #{tpu_custom_call.1} parent=11 // pred_region
          %s307 = ssub.s32 16, 16
          %308 = vsyncadd [#allocation14], %s307
          %s310 = sshll.u32 [#allocation13], 4
          %s311 = int_to_ptr.vmem [resolvable:$true] %s310
          %313 = dma.hbm_to_vmem [thread:$0]  %s7, 16, %s311, [#allocation14]
        $region40: #{tpu_custom_call.1} parent=11 // pred_fallthru
          _
      $region12: #{tpu_custom_call.1} parent=5 // pred_fallthru
        _
      %p314 = scmp.lt.s32.totalorder %s21, 2
      // Predicated region
      $region41: #{tpu_custom_call.1} parent=5 // pred_check
        %p315 = pneg %p314
      $region42: #{tpu_custom_call.1} parent=5 // pred_check_branch
        %317 = sbr.rel (%p315) target = $region44
      $region43: #{tpu_custom_call.1} parent=5 // pred_region
        // Predicated region
        $region45: #{tpu_custom_call.1} parent=43 // pred_check
          %p318 = pneg %p41
        $region46: #{tpu_custom_call.1} parent=43 // pred_check_branch
          %320 = sbr.rel (%p318) target = $region48
        $region47: #{tpu_custom_call.1} parent=43 // pred_region
          %s321 = sand.u32 %s31, 1
          %s322 = scalar_lea.sflag [#allocation3], %s321
          %s323 = sand.u32 %s31, 1
          %s324 = smul.addr %s323, 96
          %s325 = scalar_lea.vmem [#allocation2], %s324
          %s327 = ssub.s32 1536, 1536
          %328 = vsyncadd %s322, %s327
          %s329 = smul.addr %s21, 24
          %s330 = smul.addr %s329, 64
          %s331 = scalar_lea.hbm %s0, %s330
          %s333 = sshll.u32 %s325, 4
          %s334 = int_to_ptr.vmem [resolvable:$true] %s333
          %336 = dma.hbm_to_vmem [thread:$0]  %s331, 1536, %s334, %s322
        $region48: #{tpu_custom_call.1} parent=43 // pred_fallthru
          _
      $region44: #{tpu_custom_call.1} parent=5 // pred_fallthru
        _
      %p337 = scmp.le.s32.totalorder 1, %s21
      %p338 = scmp.lt.s32.totalorder %s21, 3
      %p339 = pnand %p337, %p338
      %p340 = pneg %p339
      // Predicated region
      $region49: #{tpu_custom_call.1} parent=5 // pred_check
        _
      $region50: #{tpu_custom_call.1} parent=5 // pred_check_branch
        %342 = sbr.rel (%p339) target = $region52
      $region51: #{tpu_custom_call.1} parent=5 // pred_region
        %s343 = ssub.s32 %s21, 1
        %s344 = sand.u32 %s34, 1
        %s345 = scalar_lea.sflag [#allocation3], %s344
        %s346 = sand.u32 %s34, 1
        %s347 = smul.addr %s346, 96
        %s348 = scalar_lea.vmem [#allocation2], %s347
        // Predicated region
        $region53: #{tpu_custom_call.1} parent=51 // pred_check
          %p349 = pneg %p47
        $region54: #{tpu_custom_call.1} parent=51 // pred_check_branch
          %351 = sbr.rel (%p349) target = $region56
        $region55: #{tpu_custom_call.1} parent=51 // pred_region
          %352 = dma.done %s345, 1536
        $region56: #{tpu_custom_call.1} parent=51 // pred_fallthru
          _
        // Predicated region
        $region57: #{tpu_custom_call.1} parent=51 // pred_check
          %p353 = pneg %p68
        $region58: #{tpu_custom_call.1} parent=51 // pred_check_branch
          %355 = sbr.rel (%p353) target = $region60
        $region59: #{tpu_custom_call.1} parent=51 // pred_region
          %356 = dma.done [#allocation5], 384
        $region60: #{tpu_custom_call.1} parent=51 // pred_fallthru
          _
        // Predicated region
        $region61: #{tpu_custom_call.1} parent=51 // pred_check
          %p357 = pneg %p89
        $region62: #{tpu_custom_call.1} parent=51 // pred_check_branch
          %359 = sbr.rel (%p357) target = $region64
        $region63: #{tpu_custom_call.1} parent=51 // pred_region
          %360 = dma.done [#allocation5], 384
        $region64: #{tpu_custom_call.1} parent=51 // pred_fallthru
          _
        // Predicated region
        $region65: #{tpu_custom_call.1} parent=51 // pred_check
          %p361 = pneg %p110
        $region66: #{tpu_custom_call.1} parent=51 // pred_check_branch
          %363 = sbr.rel (%p361) target = $region68
        $region67: #{tpu_custom_call.1} parent=51 // pred_region
          %364 = dma.done [#allocation8], 49152
        $region68: #{tpu_custom_call.1} parent=51 // pred_fallthru
          _
        // Predicated region
        $region69: #{tpu_custom_call.1} parent=51 // pred_check
          %p365 = pneg %p131
        $region70: #{tpu_custom_call.1} parent=51 // pred_check_branch
          %367 = sbr.rel (%p365) target = $region72
        $region71: #{tpu_custom_call.1} parent=51 // pred_region
          %368 = dma.done [#allocation8], 16
        $region72: #{tpu_custom_call.1} parent=51 // pred_fallthru
          _
        // Predicated region
        $region73: #{tpu_custom_call.1} parent=51 // pred_check
          %p369 = pneg %p152
        $region74: #{tpu_custom_call.1} parent=51 // pred_check_branch
          %371 = sbr.rel (%p369) target = $region76
        $region75: #{tpu_custom_call.1} parent=51 // pred_region
          %372 = dma.done [#allocation11], 128
        $region76: #{tpu_custom_call.1} parent=51 // pred_fallthru
          _
        // Predicated region
        $region77: #{tpu_custom_call.1} parent=51 // pred_check
          %p373 = pneg %p173
        $region78: #{tpu_custom_call.1} parent=51 // pred_check_branch
          %375 = sbr.rel (%p373) target = $region80
        $region79: #{tpu_custom_call.1} parent=51 // pred_region
          %376 = dma.done [#allocation11], 16
        $region80: #{tpu_custom_call.1} parent=51 // pred_fallthru
          _
        // Predicated region
        $region81: #{tpu_custom_call.1} parent=51 // pred_check
          %p377 = pneg %p194
        $region82: #{tpu_custom_call.1} parent=51 // pred_check_branch
          %379 = sbr.rel (%p377) target = $region84
        $region83: #{tpu_custom_call.1} parent=51 // pred_region
          %380 = dma.done [#allocation14], 16
        $region84: #{tpu_custom_call.1} parent=51 // pred_fallthru
          _
        %s381 = sand.u32 %s34, 1
        %s382 = scalar_lea.sflag [#allocation3], %s381
        %s383 = sand.u32 %s34, 1
        %s384 = smul.addr %s383, 96
        %s385 = scalar_lea.vmem [#allocation2], %s384
        %p386 = pneg %p47
        %p387 = pneg %p44
        %p388 = pneg %p68
        %p389 = pneg %p65
        %p390 = pneg %p89
        %p391 = pneg %p86
        %p392 = pneg %p110
        %p393 = pneg %p107
        %p394 = pneg %p131
        %p395 = pneg %p128
        %p396 = pneg %p152
        %p397 = pneg %p149
        %p398 = pneg %p173
        %p399 = pneg %p170
        %p400 = pneg %p194
        %p401 = pneg %p191
        %p402 = pneg %p220
        %p403 = pneg %p217
        %p404 = scmp.lt.s32.totalorder %s26, 1
        %s405 = scalar_select %p404, %s26, 1
        %s406 = smul.addr %s405, 8
        %s407 = scalar_lea.vmem %s8, %s406
        %p408 = scmp.lt.s32.totalorder %s26, 1
        %s409 = scalar_select %p408, %s26, 1
        %s410 = smul.addr %s409, 8
        %s411 = scalar_lea.vmem %s8, %s410
        %v412 = vld [vmem:[%s348] sm:$0xff]
        %v413 = vld [vmem:[%s348 + $0x8] sm:$0xff]
        %v414 = vld [vmem:[%s348 + $0x10] sm:$0xff]
        %v415 = vld [vmem:[%s348 + $0x18] sm:$0xff]
        %v416 = vld [vmem:[%s348 + $0x20] sm:$0xff]
        %v417 = vld [vmem:[%s348 + $0x28] sm:$0xff]
        %v418 = vld [vmem:[%s348 + $0x30] sm:$0xff]
        %v419 = vld [vmem:[%s348 + $0x38] sm:$0xff]
        %v420 = vld [vmem:[%s348 + $0x40] sm:$0xff]
        %v421 = vld [vmem:[%s348 + $0x48] sm:$0xff]
        %v422 = vld [vmem:[%s348 + $0x50] sm:$0xff]
        %v423 = vld [vmem:[%s348 + $0x58] sm:$0xff]
        %v424 = vld [vmem:[#allocation4] sm:$0xff]
        %v425 = vld [vmem:[#allocation4 + $0x8] sm:$0xff]
        %v426 = vld [vmem:[#allocation4 + $0x10] sm:$0xff]
        %v430 = vlaneseq
        %v431 = vshrl.u32 %v430, 7
        %v432 = vsub.s32 0, %v431
        %v433 = vrot.slane %v424, %v432
        %v434 = vlaneseq
        %v435 = vshrl.u32 %v434, 7
        %v436 = vsub.s32 1, %v435
        %v437 = vrot.slane %v424, %v436
        %v438 = vlaneseq
        %v439 = vshrl.u32 %v438, 7
        %v440 = vsub.s32 2, %v439
        %v441 = vrot.slane %v424, %v440
        %v442 = vlaneseq
        %v443 = vshrl.u32 %v442, 7
        %v444 = vsub.s32 3, %v443
        %v445 = vrot.slane %v424, %v444
        %v446 = vlaneseq
        %v447 = vshrl.u32 %v446, 7
        %v448 = vsub.s32 4, %v447
        %v449 = vrot.slane %v424, %v448
        %v450 = vlaneseq
        %v451 = vshrl.u32 %v450, 7
        %v452 = vsub.s32 5, %v451
        %v453 = vrot.slane %v424, %v452
        %v454 = vlaneseq
        %v455 = vshrl.u32 %v454, 7
        %v456 = vsub.s32 6, %v455
        %v457 = vrot.slane %v424, %v456
        %v458 = vlaneseq
        %v459 = vshrl.u32 %v458, 7
        %v460 = vsub.s32 7, %v459
        %v461 = vrot.slane %v424, %v460
        %v462 = vlaneseq
        %v463 = vshrl.u32 %v462, 7
        %v464 = vsub.s32 0, %v463
        %v465 = vrot.slane %v425, %v464
        %v466 = vlaneseq
        %v467 = vshrl.u32 %v466, 7
        %v468 = vsub.s32 1, %v467
        %v469 = vrot.slane %v425, %v468
        %v470 = vlaneseq
        %v471 = vshrl.u32 %v470, 7
        %v472 = vsub.s32 2, %v471
        %v473 = vrot.slane %v425, %v472
        %v474 = vlaneseq
        %v475 = vshrl.u32 %v474, 7
        %v476 = vsub.s32 3, %v475
        %v477 = vrot.slane %v425, %v476
        %v478 = vlaneseq
        %v479 = vshrl.u32 %v478, 7
        %v480 = vsub.s32 4, %v479
        %v481 = vrot.slane %v425, %v480
        %v482 = vlaneseq
        %v483 = vshrl.u32 %v482, 7
        %v484 = vsub.s32 5, %v483
        %v485 = vrot.slane %v425, %v484
        %v486 = vlaneseq
        %v487 = vshrl.u32 %v486, 7
        %v488 = vsub.s32 6, %v487
        %v489 = vrot.slane %v425, %v488
        %v490 = vlaneseq
        %v491 = vshrl.u32 %v490, 7
        %v492 = vsub.s32 7, %v491
        %v493 = vrot.slane %v425, %v492
        %v494 = vlaneseq
        %v495 = vshrl.u32 %v494, 7
        %v496 = vsub.s32 0, %v495
        %v497 = vrot.slane %v426, %v496
        %v498 = vlaneseq
        %v499 = vshrl.u32 %v498, 7
        %v500 = vsub.s32 1, %v499
        %v501 = vrot.slane %v426, %v500
        %v502 = vlaneseq
        %v503 = vshrl.u32 %v502, 7
        %v504 = vsub.s32 2, %v503
        %v505 = vrot.slane %v426, %v504
        %v506 = vlaneseq
        %v507 = vshrl.u32 %v506, 7
        %v508 = vsub.s32 3, %v507
        %v509 = vrot.slane %v426, %v508
        %v510 = vlaneseq
        %v511 = vshrl.u32 %v510, 7
        %v512 = vsub.s32 4, %v511
        %v513 = vrot.slane %v426, %v512
        %v514 = vlaneseq
        %v515 = vshrl.u32 %v514, 7
        %v516 = vsub.s32 5, %v515
        %v517 = vrot.slane %v426, %v516
        %v518 = vlaneseq
        %v519 = vshrl.u32 %v518, 7
        %v520 = vsub.s32 6, %v519
        %v521 = vrot.slane %v426, %v520
        %v522 = vlaneseq
        %v523 = vshrl.u32 %v522, 7
        %v524 = vsub.s32 7, %v523
        %v525 = vrot.slane %v426, %v524
        %v526 = vcombine.low %v433, %v437
        %v527 = vcombine.low %v441, %v445
        %v528 = vcombine.low %v449, %v453
        %v529 = vcombine.low %v457, %v461
        %v530 = vcombine.low %v465, %v469
        %v531 = vcombine.low %v473, %v477
        %v532 = vcombine.low %v481, %v485
        %v533 = vcombine.low %v489, %v493
        %v534 = vcombine.low %v497, %v501
        %v535 = vcombine.low %v505, %v509
        %v536 = vcombine.low %v513, %v517
        %v537 = vcombine.low %v521, %v525
        %v550 = vmul.f32 %v412, %v526
        %v551 = vmul.f32 %v413, %v527
        %v552 = vmul.f32 %v414, %v528
        %v553 = vmul.f32 %v415, %v529
        %v554 = vmul.f32 %v416, %v530
        %v555 = vmul.f32 %v417, %v531
        %v556 = vmul.f32 %v418, %v532
        %v557 = vmul.f32 %v419, %v533
        %v558 = vmul.f32 %v420, %v534
        %v559 = vmul.f32 %v421, %v535
        %v560 = vmul.f32 %v422, %v536
        %v561 = vmul.f32 %v423, %v537
        %v562 = vld [vmem:[#allocation6] sm:$0xff]
        %v563 = vld [vmem:[#allocation6 + $0x8] sm:$0xff]
        %v564 = vld [vmem:[#allocation6 + $0x10] sm:$0xff]
        %v568 = vlaneseq
        %v569 = vshrl.u32 %v568, 7
        %v570 = vsub.s32 0, %v569
        %v571 = vrot.slane %v562, %v570
        %v572 = vlaneseq
        %v573 = vshrl.u32 %v572, 7
        %v574 = vsub.s32 1, %v573
        %v575 = vrot.slane %v562, %v574
        %v576 = vlaneseq
        %v577 = vshrl.u32 %v576, 7
        %v578 = vsub.s32 2, %v577
        %v579 = vrot.slane %v562, %v578
        %v580 = vlaneseq
        %v581 = vshrl.u32 %v580, 7
        %v582 = vsub.s32 3, %v581
        %v583 = vrot.slane %v562, %v582
        %v584 = vlaneseq
        %v585 = vshrl.u32 %v584, 7
        %v586 = vsub.s32 4, %v585
        %v587 = vrot.slane %v562, %v586
        %v588 = vlaneseq
        %v589 = vshrl.u32 %v588, 7
        %v590 = vsub.s32 5, %v589
        %v591 = vrot.slane %v562, %v590
        %v592 = vlaneseq
        %v593 = vshrl.u32 %v592, 7
        %v594 = vsub.s32 6, %v593
        %v595 = vrot.slane %v562, %v594
        %v596 = vlaneseq
        %v597 = vshrl.u32 %v596, 7
        %v598 = vsub.s32 7, %v597
        %v599 = vrot.slane %v562, %v598
        %v600 = vlaneseq
        %v601 = vshrl.u32 %v600, 7
        %v602 = vsub.s32 0, %v601
        %v603 = vrot.slane %v563, %v602
        %v604 = vlaneseq
        %v605 = vshrl.u32 %v604, 7
        %v606 = vsub.s32 1, %v605
        %v607 = vrot.slane %v563, %v606
        %v608 = vlaneseq
        %v609 = vshrl.u32 %v608, 7
        %v610 = vsub.s32 2, %v609
        %v611 = vrot.slane %v563, %v610
        %v612 = vlaneseq
        %v613 = vshrl.u32 %v612, 7
        %v614 = vsub.s32 3, %v613
        %v615 = vrot.slane %v563, %v614
        %v616 = vlaneseq
        %v617 = vshrl.u32 %v616, 7
        %v618 = vsub.s32 4, %v617
        %v619 = vrot.slane %v563, %v618
        %v620 = vlaneseq
        %v621 = vshrl.u32 %v620, 7
        %v622 = vsub.s32 5, %v621
        %v623 = vrot.slane %v563, %v622
        %v624 = vlaneseq
        %v625 = vshrl.u32 %v624, 7
        %v626 = vsub.s32 6, %v625
        %v627 = vrot.slane %v563, %v626
        %v628 = vlaneseq
        %v629 = vshrl.u32 %v628, 7
        %v630 = vsub.s32 7, %v629
        %v631 = vrot.slane %v563, %v630
        %v632 = vlaneseq
        %v633 = vshrl.u32 %v632, 7
        %v634 = vsub.s32 0, %v633
        %v635 = vrot.slane %v564, %v634
        %v636 = vlaneseq
        %v637 = vshrl.u32 %v636, 7
        %v638 = vsub.s32 1, %v637
        %v639 = vrot.slane %v564, %v638
        %v640 = vlaneseq
        %v641 = vshrl.u32 %v640, 7
        %v642 = vsub.s32 2, %v641
        %v643 = vrot.slane %v564, %v642
        %v644 = vlaneseq
        %v645 = vshrl.u32 %v644, 7
        %v646 = vsub.s32 3, %v645
        %v647 = vrot.slane %v564, %v646
        %v648 = vlaneseq
        %v649 = vshrl.u32 %v648, 7
        %v650 = vsub.s32 4, %v649
        %v651 = vrot.slane %v564, %v650
        %v652 = vlaneseq
        %v653 = vshrl.u32 %v652, 7
        %v654 = vsub.s32 5, %v653
        %v655 = vrot.slane %v564, %v654
        %v656 = vlaneseq
        %v657 = vshrl.u32 %v656, 7
        %v658 = vsub.s32 6, %v657
        %v659 = vrot.slane %v564, %v658
        %v660 = vlaneseq
        %v661 = vshrl.u32 %v660, 7
        %v662 = vsub.s32 7, %v661
        %v663 = vrot.slane %v564, %v662
        %v664 = vcombine.low %v571, %v575
        %v665 = vcombine.low %v579, %v583
        %v666 = vcombine.low %v587, %v591
        %v667 = vcombine.low %v595, %v599
        %v668 = vcombine.low %v603, %v607
        %v669 = vcombine.low %v611, %v615
        %v670 = vcombine.low %v619, %v623
        %v671 = vcombine.low %v627, %v631
        %v672 = vcombine.low %v635, %v639
        %v673 = vcombine.low %v643, %v647
        %v674 = vcombine.low %v651, %v655
        %v675 = vcombine.low %v659, %v663
        %v688 = vadd.f32 %v550, %v664
        %v689 = vadd.f32 %v551, %v665
        %v690 = vadd.f32 %v552, %v666
        %v691 = vadd.f32 %v553, %v667
        %v692 = vadd.f32 %v554, %v668
        %v693 = vadd.f32 %v555, %v669
        %v694 = vadd.f32 %v556, %v670
        %v695 = vadd.f32 %v557, %v671
        %v696 = vadd.f32 %v558, %v672
        %v697 = vadd.f32 %v559, %v673
        %v698 = vadd.f32 %v560, %v674
        %v699 = vadd.f32 %v561, %v675
        %v700 = vld [vmem:[#allocation7] sm:$0xff]
        %v701 = vld [vmem:[#allocation7 + $0x8] sm:$0xff]
        %v702 = vld [vmem:[#allocation7 + $0x10] sm:$0xff]
        %v703 = vld [vmem:[#allocation7 + $0x18] sm:$0xff]
        %v704 = vld [vmem:[#allocation7 + $0x20] sm:$0xff]
        %v705 = vld [vmem:[#allocation7 + $0x28] sm:$0xff]
        %v706 = vld [vmem:[#allocation7 + $0x30] sm:$0xff]
        %v707 = vld [vmem:[#allocation7 + $0x38] sm:$0xff]
        %v708 = vld [vmem:[#allocation7 + $0x40] sm:$0xff]
        %v709 = vld [vmem:[#allocation7 + $0x48] sm:$0xff]
        %v710 = vld [vmem:[#allocation7 + $0x50] sm:$0xff]
        %v711 = vld [vmem:[#allocation7 + $0x58] sm:$0xff]
        %v712 = vld [vmem:[#allocation7 + $0x60] sm:$0xff]
        %v713 = vld [vmem:[#allocation7 + $0x68] sm:$0xff]
        %v714 = vld [vmem:[#allocation7 + $0x70] sm:$0xff]
        %v715 = vld [vmem:[#allocation7 + $0x78] sm:$0xff]
        %v716 = vld [vmem:[#allocation7 + $0x80] sm:$0xff]
        %v717 = vld [vmem:[#allocation7 + $0x88] sm:$0xff]
        %v718 = vld [vmem:[#allocation7 + $0x90] sm:$0xff]
        %v719 = vld [vmem:[#allocation7 + $0x98] sm:$0xff]
        %v720 = vld [vmem:[#allocation7 + $0xa0] sm:$0xff]
        %v721 = vld [vmem:[#allocation7 + $0xa8] sm:$0xff]
        %v722 = vld [vmem:[#allocation7 + $0xb0] sm:$0xff]
        %v723 = vld [vmem:[#allocation7 + $0xb8] sm:$0xff]
        %v724 = vld [vmem:[#allocation7 + $0xc0] sm:$0xff]
        %v725 = vld [vmem:[#allocation7 + $0xc8] sm:$0xff]
        %v726 = vld [vmem:[#allocation7 + $0xd0] sm:$0xff]
        %v727 = vld [vmem:[#allocation7 + $0xd8] sm:$0xff]
        %v728 = vld [vmem:[#allocation7 + $0xe0] sm:$0xff]
        %v729 = vld [vmem:[#allocation7 + $0xe8] sm:$0xff]
        %v730 = vld [vmem:[#allocation7 + $0xf0] sm:$0xff]
        %v731 = vld [vmem:[#allocation7 + $0xf8] sm:$0xff]
        %v732 = vld [vmem:[#allocation7 + $0x100] sm:$0xff]
        %v733 = vld [vmem:[#allocation7 + $0x108] sm:$0xff]
        %v734 = vld [vmem:[#allocation7 + $0x110] sm:$0xff]
        %v735 = vld [vmem:[#allocation7 + $0x118] sm:$0xff]
        %v736 = vld [vmem:[#allocation7 + $0x120] sm:$0xff]
        %v737 = vld [vmem:[#allocation7 + $0x128] sm:$0xff]
        %v738 = vld [vmem:[#allocation7 + $0x130] sm:$0xff]
        %v739 = vld [vmem:[#allocation7 + $0x138] sm:$0xff]
        %v740 = vld [vmem:[#allocation7 + $0x140] sm:$0xff]
        %v741 = vld [vmem:[#allocation7 + $0x148] sm:$0xff]
        %v742 = vld [vmem:[#allocation7 + $0x150] sm:$0xff]
        %v743 = vld [vmem:[#allocation7 + $0x158] sm:$0xff]
        %v744 = vld [vmem:[#allocation7 + $0x160] sm:$0xff]
        %v745 = vld [vmem:[#allocation7 + $0x168] sm:$0xff]
        %v746 = vld [vmem:[#allocation7 + $0x170] sm:$0xff]
        %v747 = vld [vmem:[#allocation7 + $0x178] sm:$0xff]
        %v748 = vld [vmem:[#allocation7 + $0x180] sm:$0xff]
        %v749 = vld [vmem:[#allocation7 + $0x188] sm:$0xff]
        %v750 = vld [vmem:[#allocation7 + $0x190] sm:$0xff]
        %v751 = vld [vmem:[#allocation7 + $0x198] sm:$0xff]
        %v752 = vld [vmem:[#allocation7 + $0x1a0] sm:$0xff]
        %v753 = vld [vmem:[#allocation7 + $0x1a8] sm:$0xff]
        %v754 = vld [vmem:[#allocation7 + $0x1b0] sm:$0xff]
        %v755 = vld [vmem:[#allocation7 + $0x1b8] sm:$0xff]
        %v756 = vld [vmem:[#allocation7 + $0x1c0] sm:$0xff]
        %v757 = vld [vmem:[#allocation7 + $0x1c8] sm:$0xff]
        %v758 = vld [vmem:[#allocation7 + $0x1d0] sm:$0xff]
        %v759 = vld [vmem:[#allocation7 + $0x1d8] sm:$0xff]
        %v760 = vld [vmem:[#allocation7 + $0x1e0] sm:$0xff]
        %v761 = vld [vmem:[#allocation7 + $0x1e8] sm:$0xff]
        %v762 = vld [vmem:[#allocation7 + $0x1f0] sm:$0xff]
        %v763 = vld [vmem:[#allocation7 + $0x1f8] sm:$0xff]
        %v764 = vld [vmem:[#allocation7 + $0x200] sm:$0xff]
        %v765 = vld [vmem:[#allocation7 + $0x208] sm:$0xff]
        %v766 = vld [vmem:[#allocation7 + $0x210] sm:$0xff]
        %v767 = vld [vmem:[#allocation7 + $0x218] sm:$0xff]
        %v768 = vld [vmem:[#allocation7 + $0x220] sm:$0xff]
        %v769 = vld [vmem:[#allocation7 + $0x228] sm:$0xff]
        %v770 = vld [vmem:[#allocation7 + $0x230] sm:$0xff]
        %v771 = vld [vmem:[#allocation7 + $0x238] sm:$0xff]
        %v772 = vld [vmem:[#allocation7 + $0x240] sm:$0xff]
        %v773 = vld [vmem:[#allocation7 + $0x248] sm:$0xff]
        %v774 = vld [vmem:[#allocation7 + $0x250] sm:$0xff]
        %v775 = vld [vmem:[#allocation7 + $0x258] sm:$0xff]
        %v776 = vld [vmem:[#allocation7 + $0x260] sm:$0xff]
        %v777 = vld [vmem:[#allocation7 + $0x268] sm:$0xff]
        %v778 = vld [vmem:[#allocation7 + $0x270] sm:$0xff]
        %v779 = vld [vmem:[#allocation7 + $0x278] sm:$0xff]
        %v780 = vld [vmem:[#allocation7 + $0x280] sm:$0xff]
        %v781 = vld [vmem:[#allocation7 + $0x288] sm:$0xff]
        %v782 = vld [vmem:[#allocation7 + $0x290] sm:$0xff]
        %v783 = vld [vmem:[#allocation7 + $0x298] sm:$0xff]
        %v784 = vld [vmem:[#allocation7 + $0x2a0] sm:$0xff]
        %v785 = vld [vmem:[#allocation7 + $0x2a8] sm:$0xff]
        %v786 = vld [vmem:[#allocation7 + $0x2b0] sm:$0xff]
        %v787 = vld [vmem:[#allocation7 + $0x2b8] sm:$0xff]
        %v788 = vld [vmem:[#allocation7 + $0x2c0] sm:$0xff]
        %v789 = vld [vmem:[#allocation7 + $0x2c8] sm:$0xff]
        %v790 = vld [vmem:[#allocation7 + $0x2d0] sm:$0xff]
        %v791 = vld [vmem:[#allocation7 + $0x2d8] sm:$0xff]
        %v792 = vld [vmem:[#allocation7 + $0x2e0] sm:$0xff]
        %v793 = vld [vmem:[#allocation7 + $0x2e8] sm:$0xff]
        %v794 = vld [vmem:[#allocation7 + $0x2f0] sm:$0xff]
        %v795 = vld [vmem:[#allocation7 + $0x2f8] sm:$0xff]
        %v796 = vld [vmem:[#allocation7 + $0x300] sm:$0xff]
        %v797 = vld [vmem:[#allocation7 + $0x308] sm:$0xff]
        %v798 = vld [vmem:[#allocation7 + $0x310] sm:$0xff]
        %v799 = vld [vmem:[#allocation7 + $0x318] sm:$0xff]
        %v800 = vld [vmem:[#allocation7 + $0x320] sm:$0xff]
        %v801 = vld [vmem:[#allocation7 + $0x328] sm:$0xff]
        %v802 = vld [vmem:[#allocation7 + $0x330] sm:$0xff]
        %v803 = vld [vmem:[#allocation7 + $0x338] sm:$0xff]
        %v804 = vld [vmem:[#allocation7 + $0x340] sm:$0xff]
        %v805 = vld [vmem:[#allocation7 + $0x348] sm:$0xff]
        %v806 = vld [vmem:[#allocation7 + $0x350] sm:$0xff]
        %v807 = vld [vmem:[#allocation7 + $0x358] sm:$0xff]
        %v808 = vld [vmem:[#allocation7 + $0x360] sm:$0xff]
        %v809 = vld [vmem:[#allocation7 + $0x368] sm:$0xff]
        %v810 = vld [vmem:[#allocation7 + $0x370] sm:$0xff]
        %v811 = vld [vmem:[#allocation7 + $0x378] sm:$0xff]
        %v812 = vld [vmem:[#allocation7 + $0x380] sm:$0xff]
        %v813 = vld [vmem:[#allocation7 + $0x388] sm:$0xff]
        %v814 = vld [vmem:[#allocation7 + $0x390] sm:$0xff]
        %v815 = vld [vmem:[#allocation7 + $0x398] sm:$0xff]
        %v816 = vld [vmem:[#allocation7 + $0x3a0] sm:$0xff]
        %v817 = vld [vmem:[#allocation7 + $0x3a8] sm:$0xff]
        %v818 = vld [vmem:[#allocation7 + $0x3b0] sm:$0xff]
        %v819 = vld [vmem:[#allocation7 + $0x3b8] sm:$0xff]
        %v820 = vld [vmem:[#allocation7 + $0x3c0] sm:$0xff]
        %v821 = vld [vmem:[#allocation7 + $0x3c8] sm:$0xff]
        %v822 = vld [vmem:[#allocation7 + $0x3d0] sm:$0xff]
        %v823 = vld [vmem:[#allocation7 + $0x3d8] sm:$0xff]
        %v824 = vld [vmem:[#allocation7 + $0x3e0] sm:$0xff]
        %v825 = vld [vmem:[#allocation7 + $0x3e8] sm:$0xff]
        %v826 = vld [vmem:[#allocation7 + $0x3f0] sm:$0xff]
        %v827 = vld [vmem:[#allocation7 + $0x3f8] sm:$0xff]
        %v828 = vld [vmem:[#allocation7 + $0x400] sm:$0xff]
        %v829 = vld [vmem:[#allocation7 + $0x408] sm:$0xff]
        %v830 = vld [vmem:[#allocation7 + $0x410] sm:$0xff]
        %v831 = vld [vmem:[#allocation7 + $0x418] sm:$0xff]
        %v832 = vld [vmem:[#allocation7 + $0x420] sm:$0xff]
        %v833 = vld [vmem:[#allocation7 + $0x428] sm:$0xff]
        %v834 = vld [vmem:[#allocation7 + $0x430] sm:$0xff]
        %v835 = vld [vmem:[#allocation7 + $0x438] sm:$0xff]
        %v836 = vld [vmem:[#allocation7 + $0x440] sm:$0xff]
        %v837 = vld [vmem:[#allocation7 + $0x448] sm:$0xff]
        %v838 = vld [vmem:[#allocation7 + $0x450] sm:$0xff]
        %v839 = vld [vmem:[#allocation7 + $0x458] sm:$0xff]
        %v840 = vld [vmem:[#allocation7 + $0x460] sm:$0xff]
        %v841 = vld [vmem:[#allocation7 + $0x468] sm:$0xff]
        %v842 = vld [vmem:[#allocation7 + $0x470] sm:$0xff]
        %v843 = vld [vmem:[#allocation7 + $0x478] sm:$0xff]
        %v844 = vld [vmem:[#allocation7 + $0x480] sm:$0xff]
        %v845 = vld [vmem:[#allocation7 + $0x488] sm:$0xff]
        %v846 = vld [vmem:[#allocation7 + $0x490] sm:$0xff]
        %v847 = vld [vmem:[#allocation7 + $0x498] sm:$0xff]
        %v848 = vld [vmem:[#allocation7 + $0x4a0] sm:$0xff]
        %v849 = vld [vmem:[#allocation7 + $0x4a8] sm:$0xff]
        %v850 = vld [vmem:[#allocation7 + $0x4b0] sm:$0xff]
        %v851 = vld [vmem:[#allocation7 + $0x4b8] sm:$0xff]
        %v852 = vld [vmem:[#allocation7 + $0x4c0] sm:$0xff]
        %v853 = vld [vmem:[#allocation7 + $0x4c8] sm:$0xff]
        %v854 = vld [vmem:[#allocation7 + $0x4d0] sm:$0xff]
        %v855 = vld [vmem:[#allocation7 + $0x4d8] sm:$0xff]
        %v856 = vld [vmem:[#allocation7 + $0x4e0] sm:$0xff]
        %v857 = vld [vmem:[#allocation7 + $0x4e8] sm:$0xff]
        %v858 = vld [vmem:[#allocation7 + $0x4f0] sm:$0xff]
        %v859 = vld [vmem:[#allocation7 + $0x4f8] sm:$0xff]
        %v860 = vld [vmem:[#allocation7 + $0x500] sm:$0xff]
        %v861 = vld [vmem:[#allocation7 + $0x508] sm:$0xff]
        %v862 = vld [vmem:[#allocation7 + $0x510] sm:$0xff]
        %v863 = vld [vmem:[#allocation7 + $0x518] sm:$0xff]
        %v864 = vld [vmem:[#allocation7 + $0x520] sm:$0xff]
        %v865 = vld [vmem:[#allocation7 + $0x528] sm:$0xff]
        %v866 = vld [vmem:[#allocation7 + $0x530] sm:$0xff]
        %v867 = vld [vmem:[#allocation7 + $0x538] sm:$0xff]
        %v868 = vld [vmem:[#allocation7 + $0x540] sm:$0xff]
        %v869 = vld [vmem:[#allocation7 + $0x548] sm:$0xff]
        %v870 = vld [vmem:[#allocation7 + $0x550] sm:$0xff]
        %v871 = vld [vmem:[#allocation7 + $0x558] sm:$0xff]
        %v872 = vld [vmem:[#allocation7 + $0x560] sm:$0xff]
        %v873 = vld [vmem:[#allocation7 + $0x568] sm:$0xff]
        %v874 = vld [vmem:[#allocation7 + $0x570] sm:$0xff]
        %v875 = vld [vmem:[#allocation7 + $0x578] sm:$0xff]
        %v876 = vld [vmem:[#allocation7 + $0x580] sm:$0xff]
        %v877 = vld [vmem:[#allocation7 + $0x588] sm:$0xff]
        %v878 = vld [vmem:[#allocation7 + $0x590] sm:$0xff]
        %v879 = vld [vmem:[#allocation7 + $0x598] sm:$0xff]
        %v880 = vld [vmem:[#allocation7 + $0x5a0] sm:$0xff]
        %v881 = vld [vmem:[#allocation7 + $0x5a8] sm:$0xff]
        %v882 = vld [vmem:[#allocation7 + $0x5b0] sm:$0xff]
        %v883 = vld [vmem:[#allocation7 + $0x5b8] sm:$0xff]
        %v884 = vld [vmem:[#allocation7 + $0x5c0] sm:$0xff]
        %v885 = vld [vmem:[#allocation7 + $0x5c8] sm:$0xff]
        %v886 = vld [vmem:[#allocation7 + $0x5d0] sm:$0xff]
        %v887 = vld [vmem:[#allocation7 + $0x5d8] sm:$0xff]
        %v888 = vld [vmem:[#allocation7 + $0x5e0] sm:$0xff]
        %v889 = vld [vmem:[#allocation7 + $0x5e8] sm:$0xff]
        %v890 = vld [vmem:[#allocation7 + $0x5f0] sm:$0xff]
        %v891 = vld [vmem:[#allocation7 + $0x5f8] sm:$0xff]
        %v892 = vld [vmem:[#allocation7 + $0x600] sm:$0xff]
        %v893 = vld [vmem:[#allocation7 + $0x608] sm:$0xff]
        %v894 = vld [vmem:[#allocation7 + $0x610] sm:$0xff]
        %v895 = vld [vmem:[#allocation7 + $0x618] sm:$0xff]
        %v896 = vld [vmem:[#allocation7 + $0x620] sm:$0xff]
        %v897 = vld [vmem:[#allocation7 + $0x628] sm:$0xff]
        %v898 = vld [vmem:[#allocation7 + $0x630] sm:$0xff]
        %v899 = vld [vmem:[#allocation7 + $0x638] sm:$0xff]
        %v900 = vld [vmem:[#allocation7 + $0x640] sm:$0xff]
        %v901 = vld [vmem:[#allocation7 + $0x648] sm:$0xff]
        %v902 = vld [vmem:[#allocation7 + $0x650] sm:$0xff]
        %v903 = vld [vmem:[#allocation7 + $0x658] sm:$0xff]
        %v904 = vld [vmem:[#allocation7 + $0x660] sm:$0xff]
        %v905 = vld [vmem:[#allocation7 + $0x668] sm:$0xff]
        %v906 = vld [vmem:[#allocation7 + $0x670] sm:$0xff]
        %v907 = vld [vmem:[#allocation7 + $0x678] sm:$0xff]
        %v908 = vld [vmem:[#allocation7 + $0x680] sm:$0xff]
        %v909 = vld [vmem:[#allocation7 + $0x688] sm:$0xff]
        %v910 = vld [vmem:[#allocation7 + $0x690] sm:$0xff]
        %v911 = vld [vmem:[#allocation7 + $0x698] sm:$0xff]
        %v912 = vld [vmem:[#allocation7 + $0x6a0] sm:$0xff]
        %v913 = vld [vmem:[#allocation7 + $0x6a8] sm:$0xff]
        %v914 = vld [vmem:[#allocation7 + $0x6b0] sm:$0xff]
        %v915 = vld [vmem:[#allocation7 + $0x6b8] sm:$0xff]
        %v916 = vld [vmem:[#allocation7 + $0x6c0] sm:$0xff]
        %v917 = vld [vmem:[#allocation7 + $0x6c8] sm:$0xff]
        %v918 = vld [vmem:[#allocation7 + $0x6d0] sm:$0xff]
        %v919 = vld [vmem:[#allocation7 + $0x6d8] sm:$0xff]
        %v920 = vld [vmem:[#allocation7 + $0x6e0] sm:$0xff]
        %v921 = vld [vmem:[#allocation7 + $0x6e8] sm:$0xff]
        %v922 = vld [vmem:[#allocation7 + $0x6f0] sm:$0xff]
        %v923 = vld [vmem:[#allocation7 + $0x6f8] sm:$0xff]
        %v924 = vld [vmem:[#allocation7 + $0x700] sm:$0xff]
        %v925 = vld [vmem:[#allocation7 + $0x708] sm:$0xff]
        %v926 = vld [vmem:[#allocation7 + $0x710] sm:$0xff]
        %v927 = vld [vmem:[#allocation7 + $0x718] sm:$0xff]
        %v928 = vld [vmem:[#allocation7 + $0x720] sm:$0xff]
        %v929 = vld [vmem:[#allocation7 + $0x728] sm:$0xff]
        %v930 = vld [vmem:[#allocation7 + $0x730] sm:$0xff]
        %v931 = vld [vmem:[#allocation7 + $0x738] sm:$0xff]
        %v932 = vld [vmem:[#allocation7 + $0x740] sm:$0xff]
        %v933 = vld [vmem:[#allocation7 + $0x748] sm:$0xff]
        %v934 = vld [vmem:[#allocation7 + $0x750] sm:$0xff]
        %v935 = vld [vmem:[#allocation7 + $0x758] sm:$0xff]
        %v936 = vld [vmem:[#allocation7 + $0x760] sm:$0xff]
        %v937 = vld [vmem:[#allocation7 + $0x768] sm:$0xff]
        %v938 = vld [vmem:[#allocation7 + $0x770] sm:$0xff]
        %v939 = vld [vmem:[#allocation7 + $0x778] sm:$0xff]
        %v940 = vld [vmem:[#allocation7 + $0x780] sm:$0xff]
        %v941 = vld [vmem:[#allocation7 + $0x788] sm:$0xff]
        %v942 = vld [vmem:[#allocation7 + $0x790] sm:$0xff]
        %v943 = vld [vmem:[#allocation7 + $0x798] sm:$0xff]
        %v944 = vld [vmem:[#allocation7 + $0x7a0] sm:$0xff]
        %v945 = vld [vmem:[#allocation7 + $0x7a8] sm:$0xff]
        %v946 = vld [vmem:[#allocation7 + $0x7b0] sm:$0xff]
        %v947 = vld [vmem:[#allocation7 + $0x7b8] sm:$0xff]
        %v948 = vld [vmem:[#allocation7 + $0x7c0] sm:$0xff]
        %v949 = vld [vmem:[#allocation7 + $0x7c8] sm:$0xff]
        %v950 = vld [vmem:[#allocation7 + $0x7d0] sm:$0xff]
        %v951 = vld [vmem:[#allocation7 + $0x7d8] sm:$0xff]
        %v952 = vld [vmem:[#allocation7 + $0x7e0] sm:$0xff]
        %v953 = vld [vmem:[#allocation7 + $0x7e8] sm:$0xff]
        %v954 = vld [vmem:[#allocation7 + $0x7f0] sm:$0xff]
        %v955 = vld [vmem:[#allocation7 + $0x7f8] sm:$0xff]
        %v956 = vld [vmem:[#allocation7 + $0x800] sm:$0xff]
        %v957 = vld [vmem:[#allocation7 + $0x808] sm:$0xff]
        %v958 = vld [vmem:[#allocation7 + $0x810] sm:$0xff]
        %v959 = vld [vmem:[#allocation7 + $0x818] sm:$0xff]
        %v960 = vld [vmem:[#allocation7 + $0x820] sm:$0xff]
        %v961 = vld [vmem:[#allocation7 + $0x828] sm:$0xff]
        %v962 = vld [vmem:[#allocation7 + $0x830] sm:$0xff]
        %v963 = vld [vmem:[#allocation7 + $0x838] sm:$0xff]
        %v964 = vld [vmem:[#allocation7 + $0x840] sm:$0xff]
        %v965 = vld [vmem:[#allocation7 + $0x848] sm:$0xff]
        %v966 = vld [vmem:[#allocation7 + $0x850] sm:$0xff]
        %v967 = vld [vmem:[#allocation7 + $0x858] sm:$0xff]
        %v968 = vld [vmem:[#allocation7 + $0x860] sm:$0xff]
        %v969 = vld [vmem:[#allocation7 + $0x868] sm:$0xff]
        %v970 = vld [vmem:[#allocation7 + $0x870] sm:$0xff]
        %v971 = vld [vmem:[#allocation7 + $0x878] sm:$0xff]
        %v972 = vld [vmem:[#allocation7 + $0x880] sm:$0xff]
        %v973 = vld [vmem:[#allocation7 + $0x888] sm:$0xff]
        %v974 = vld [vmem:[#allocation7 + $0x890] sm:$0xff]
        %v975 = vld [vmem:[#allocation7 + $0x898] sm:$0xff]
        %v976 = vld [vmem:[#allocation7 + $0x8a0] sm:$0xff]
        %v977 = vld [vmem:[#allocation7 + $0x8a8] sm:$0xff]
        %v978 = vld [vmem:[#allocation7 + $0x8b0] sm:$0xff]
        %v979 = vld [vmem:[#allocation7 + $0x8b8] sm:$0xff]
        %v980 = vld [vmem:[#allocation7 + $0x8c0] sm:$0xff]
        %v981 = vld [vmem:[#allocation7 + $0x8c8] sm:$0xff]
        %v982 = vld [vmem:[#allocation7 + $0x8d0] sm:$0xff]
        %v983 = vld [vmem:[#allocation7 + $0x8d8] sm:$0xff]
        %v984 = vld [vmem:[#allocation7 + $0x8e0] sm:$0xff]
        %v985 = vld [vmem:[#allocation7 + $0x8e8] sm:$0xff]
        %v986 = vld [vmem:[#allocation7 + $0x8f0] sm:$0xff]
        %v987 = vld [vmem:[#allocation7 + $0x8f8] sm:$0xff]
        %v988 = vld [vmem:[#allocation7 + $0x900] sm:$0xff]
        %v989 = vld [vmem:[#allocation7 + $0x908] sm:$0xff]
        %v990 = vld [vmem:[#allocation7 + $0x910] sm:$0xff]
        %v991 = vld [vmem:[#allocation7 + $0x918] sm:$0xff]
        %v992 = vld [vmem:[#allocation7 + $0x920] sm:$0xff]
        %v993 = vld [vmem:[#allocation7 + $0x928] sm:$0xff]
        %v994 = vld [vmem:[#allocation7 + $0x930] sm:$0xff]
        %v995 = vld [vmem:[#allocation7 + $0x938] sm:$0xff]
        %v996 = vld [vmem:[#allocation7 + $0x940] sm:$0xff]
        %v997 = vld [vmem:[#allocation7 + $0x948] sm:$0xff]
        %v998 = vld [vmem:[#allocation7 + $0x950] sm:$0xff]
        %v999 = vld [vmem:[#allocation7 + $0x958] sm:$0xff]
        %v1000 = vld [vmem:[#allocation7 + $0x960] sm:$0xff]
        %v1001 = vld [vmem:[#allocation7 + $0x968] sm:$0xff]
        %v1002 = vld [vmem:[#allocation7 + $0x970] sm:$0xff]
        %v1003 = vld [vmem:[#allocation7 + $0x978] sm:$0xff]
        %v1004 = vld [vmem:[#allocation7 + $0x980] sm:$0xff]
        %v1005 = vld [vmem:[#allocation7 + $0x988] sm:$0xff]
        %v1006 = vld [vmem:[#allocation7 + $0x990] sm:$0xff]
        %v1007 = vld [vmem:[#allocation7 + $0x998] sm:$0xff]
        %v1008 = vld [vmem:[#allocation7 + $0x9a0] sm:$0xff]
        %v1009 = vld [vmem:[#allocation7 + $0x9a8] sm:$0xff]
        %v1010 = vld [vmem:[#allocation7 + $0x9b0] sm:$0xff]
        %v1011 = vld [vmem:[#allocation7 + $0x9b8] sm:$0xff]
        %v1012 = vld [vmem:[#allocation7 + $0x9c0] sm:$0xff]
        %v1013 = vld [vmem:[#allocation7 + $0x9c8] sm:$0xff]
        %v1014 = vld [vmem:[#allocation7 + $0x9d0] sm:$0xff]
        %v1015 = vld [vmem:[#allocation7 + $0x9d8] sm:$0xff]
        %v1016 = vld [vmem:[#allocation7 + $0x9e0] sm:$0xff]
        %v1017 = vld [vmem:[#allocation7 + $0x9e8] sm:$0xff]
        %v1018 = vld [vmem:[#allocation7 + $0x9f0] sm:$0xff]
        %v1019 = vld [vmem:[#allocation7 + $0x9f8] sm:$0xff]
        %v1020 = vld [vmem:[#allocation7 + $0xa00] sm:$0xff]
        %v1021 = vld [vmem:[#allocation7 + $0xa08] sm:$0xff]
        %v1022 = vld [vmem:[#allocation7 + $0xa10] sm:$0xff]
        %v1023 = vld [vmem:[#allocation7 + $0xa18] sm:$0xff]
        %v1024 = vld [vmem:[#allocation7 + $0xa20] sm:$0xff]
        %v1025 = vld [vmem:[#allocation7 + $0xa28] sm:$0xff]
        %v1026 = vld [vmem:[#allocation7 + $0xa30] sm:$0xff]
        %v1027 = vld [vmem:[#allocation7 + $0xa38] sm:$0xff]
        %v1028 = vld [vmem:[#allocation7 + $0xa40] sm:$0xff]
        %v1029 = vld [vmem:[#allocation7 + $0xa48] sm:$0xff]
        %v1030 = vld [vmem:[#allocation7 + $0xa50] sm:$0xff]
        %v1031 = vld [vmem:[#allocation7 + $0xa58] sm:$0xff]
        %v1032 = vld [vmem:[#allocation7 + $0xa60] sm:$0xff]
        %v1033 = vld [vmem:[#allocation7 + $0xa68] sm:$0xff]
        %v1034 = vld [vmem:[#allocation7 + $0xa70] sm:$0xff]
        %v1035 = vld [vmem:[#allocation7 + $0xa78] sm:$0xff]
        %v1036 = vld [vmem:[#allocation7 + $0xa80] sm:$0xff]
        %v1037 = vld [vmem:[#allocation7 + $0xa88] sm:$0xff]
        %v1038 = vld [vmem:[#allocation7 + $0xa90] sm:$0xff]
        %v1039 = vld [vmem:[#allocation7 + $0xa98] sm:$0xff]
        %v1040 = vld [vmem:[#allocation7 + $0xaa0] sm:$0xff]
        %v1041 = vld [vmem:[#allocation7 + $0xaa8] sm:$0xff]
        %v1042 = vld [vmem:[#allocation7 + $0xab0] sm:$0xff]
        %v1043 = vld [vmem:[#allocation7 + $0xab8] sm:$0xff]
        %v1044 = vld [vmem:[#allocation7 + $0xac0] sm:$0xff]
        %v1045 = vld [vmem:[#allocation7 + $0xac8] sm:$0xff]
        %v1046 = vld [vmem:[#allocation7 + $0xad0] sm:$0xff]
        %v1047 = vld [vmem:[#allocation7 + $0xad8] sm:$0xff]
        %v1048 = vld [vmem:[#allocation7 + $0xae0] sm:$0xff]
        %v1049 = vld [vmem:[#allocation7 + $0xae8] sm:$0xff]
        %v1050 = vld [vmem:[#allocation7 + $0xaf0] sm:$0xff]
        %v1051 = vld [vmem:[#allocation7 + $0xaf8] sm:$0xff]
        %v1052 = vld [vmem:[#allocation7 + $0xb00] sm:$0xff]
        %v1053 = vld [vmem:[#allocation7 + $0xb08] sm:$0xff]
        %v1054 = vld [vmem:[#allocation7 + $0xb10] sm:$0xff]
        %v1055 = vld [vmem:[#allocation7 + $0xb18] sm:$0xff]
        %v1056 = vld [vmem:[#allocation7 + $0xb20] sm:$0xff]
        %v1057 = vld [vmem:[#allocation7 + $0xb28] sm:$0xff]
        %v1058 = vld [vmem:[#allocation7 + $0xb30] sm:$0xff]
        %v1059 = vld [vmem:[#allocation7 + $0xb38] sm:$0xff]
        %v1060 = vld [vmem:[#allocation7 + $0xb40] sm:$0xff]
        %v1061 = vld [vmem:[#allocation7 + $0xb48] sm:$0xff]
        %v1062 = vld [vmem:[#allocation7 + $0xb50] sm:$0xff]
        %v1063 = vld [vmem:[#allocation7 + $0xb58] sm:$0xff]
        %v1064 = vld [vmem:[#allocation7 + $0xb60] sm:$0xff]
        %v1065 = vld [vmem:[#allocation7 + $0xb68] sm:$0xff]
        %v1066 = vld [vmem:[#allocation7 + $0xb70] sm:$0xff]
        %v1067 = vld [vmem:[#allocation7 + $0xb78] sm:$0xff]
        %v1068 = vld [vmem:[#allocation7 + $0xb80] sm:$0xff]
        %v1069 = vld [vmem:[#allocation7 + $0xb88] sm:$0xff]
        %v1070 = vld [vmem:[#allocation7 + $0xb90] sm:$0xff]
        %v1071 = vld [vmem:[#allocation7 + $0xb98] sm:$0xff]
        %v1072 = vld [vmem:[#allocation7 + $0xba0] sm:$0xff]
        %v1073 = vld [vmem:[#allocation7 + $0xba8] sm:$0xff]
        %v1074 = vld [vmem:[#allocation7 + $0xbb0] sm:$0xff]
        %v1075 = vld [vmem:[#allocation7 + $0xbb8] sm:$0xff]
        %v1076 = vld [vmem:[#allocation7 + $0xbc0] sm:$0xff]
        %v1077 = vld [vmem:[#allocation7 + $0xbc8] sm:$0xff]
        %v1078 = vld [vmem:[#allocation7 + $0xbd0] sm:$0xff]
        %v1079 = vld [vmem:[#allocation7 + $0xbd8] sm:$0xff]
        %v1080 = vld [vmem:[#allocation7 + $0xbe0] sm:$0xff]
        %v1081 = vld [vmem:[#allocation7 + $0xbe8] sm:$0xff]
        %v1082 = vld [vmem:[#allocation7 + $0xbf0] sm:$0xff]
        %v1083 = vld [vmem:[#allocation7 + $0xbf8] sm:$0xff]
        %v1096 = vcombine.high %v688, %v688
        %v1097 = vcombine.high %v689, %v689
        %v1098 = vcombine.high %v690, %v690
        %v1099 = vcombine.high %v691, %v691
        %v1100 = vcombine.high %v692, %v692
        %v1101 = vcombine.high %v693, %v693
        %v1102 = vcombine.high %v694, %v694
        %v1103 = vcombine.high %v695, %v695
        %v1104 = vcombine.high %v696, %v696
        %v1105 = vcombine.high %v697, %v697
        %v1106 = vcombine.high %v698, %v698
        %v1107 = vcombine.high %v699, %v699
        %1120 = vmatprep.subr.mxu0 0.0
        %1121 = vmatpush1.msra.mxu0 %v700
        %1122 = vmatprep.subr.mxu0 0.0
        %1123 = vmatpush1.msra.mxu0 %v701
        %1124 = vmatprep.subr.mxu0 0.0
        %1125 = vmatpush1.msra.mxu0 %v702
        %1126 = vmatprep.subr.mxu0 0.0
        %1127 = vmatpush1.msra.mxu0 %v703
        %1128 = vmatprep.subr.mxu0 0.0
        %1129 = vmatpush1.msra.mxu0 %v704
        %1130 = vmatprep.subr.mxu0 0.0
        %1131 = vmatpush1.msra.mxu0 %v705
        %1132 = vmatprep.subr.mxu0 0.0
        %1133 = vmatpush1.msra.mxu0 %v706
        %1134 = vmatprep.subr.mxu0 0.0
        %1135 = vmatpush1.msra.mxu0 %v707
        %1136 = vmatprep.subr.mxu0 0.0
        %1137 = vmatpush1.msra.mxu0 %v708
        %1138 = vmatprep.subr.mxu0 0.0
        %1139 = vmatpush1.msra.mxu0 %v709
        %1140 = vmatprep.subr.mxu0 0.0
        %1141 = vmatpush1.msra.mxu0 %v710
        %1142 = vmatprep.subr.mxu0 0.0
        %1143 = vmatpush1.msra.mxu0 %v711
        %1144 = vmatprep.subr.mxu0 0.0
        %1145 = vmatpush1.msra.mxu0 %v712
        %1146 = vmatprep.subr.mxu0 0.0
        %1147 = vmatpush1.msra.mxu0 %v713
        %1148 = vmatprep.subr.mxu0 0.0
        %1149 = vmatpush1.msra.mxu0 %v714
        %1150 = vmatprep.subr.mxu0 0.0
        %1151 = vmatpush1.msra.mxu0 %v715
        %1152 = vmatprep.subr.mxu0 0.0
        %1153 = vmatpush1.msra.mxu0 %v716
        %1154 = vmatprep.subr.mxu0 0.0
        %1155 = vmatpush1.msra.mxu0 %v717
        %1156 = vmatprep.subr.mxu0 0.0
        %1157 = vmatpush1.msra.mxu0 %v718
        %1158 = vmatprep.subr.mxu0 0.0
        %1159 = vmatpush1.msra.mxu0 %v719
        %1160 = vmatprep.subr.mxu0 0.0
        %1161 = vmatpush1.msra.mxu0 %v720
        %1162 = vmatprep.subr.mxu0 0.0
        %1163 = vmatpush1.msra.mxu0 %v721
        %1164 = vmatprep.subr.mxu0 0.0
        %1165 = vmatpush1.msra.mxu0 %v722
        %1166 = vmatprep.subr.mxu0 0.0
        %1167 = vmatpush1.msra.mxu0 %v723
        %1168 = vmatprep.subr.mxu0 0.0
        %1169 = vmatpush1.msra.mxu0 %v724
        %1170 = vmatprep.subr.mxu0 0.0
        %1171 = vmatpush1.msra.mxu0 %v725
        %1172 = vmatprep.subr.mxu0 0.0
        %1173 = vmatpush1.msra.mxu0 %v726
        %1174 = vmatprep.subr.mxu0 0.0
        %1175 = vmatpush1.msra.mxu0 %v727
        %1176 = vmatprep.subr.mxu0 0.0
        %1177 = vmatpush1.msra.mxu0 %v728
        %1178 = vmatprep.subr.mxu0 0.0
        %1179 = vmatpush1.msra.mxu0 %v729
        %1180 = vmatprep.subr.mxu0 0.0
        %1181 = vmatpush1.msra.mxu0 %v730
        %1182 = vmatprep.subr.mxu0 0.0
        %1183 = vmatpush1.msra.mxu0 %v731
        %1184 = vmatprep.mubr.f32.mxu0 %v1096
        %1185 = vmatmul.mubr.f32.gmra.mrb[0].mxu0 %v688
        %v1186 = vpop.f32.mrb[0].mxu0
        %v1187 = vadd.f32 0.0, %v1186
        %v1188 = vpop.f32.mrb[0].mxu0
        %1189 = vdwg.mxu0
        %1190 = vmatprep.subr.mxu0 0.0
        %1191 = vmatpush1.msra.mxu0 %v732
        %1192 = vmatprep.subr.mxu0 0.0
        %1193 = vmatpush1.msra.mxu0 %v733
        %1194 = vmatprep.subr.mxu0 0.0
        %1195 = vmatpush1.msra.mxu0 %v734
        %1196 = vmatprep.subr.mxu0 0.0
        %1197 = vmatpush1.msra.mxu0 %v735
        %1198 = vmatprep.subr.mxu0 0.0
        %1199 = vmatpush1.msra.mxu0 %v736
        %1200 = vmatprep.subr.mxu0 0.0
        %1201 = vmatpush1.msra.mxu0 %v737
        %1202 = vmatprep.subr.mxu0 0.0
        %1203 = vmatpush1.msra.mxu0 %v738
        %1204 = vmatprep.subr.mxu0 0.0
        %1205 = vmatpush1.msra.mxu0 %v739
        %1206 = vmatprep.subr.mxu0 0.0
        %1207 = vmatpush1.msra.mxu0 %v740
        %1208 = vmatprep.subr.mxu0 0.0
        %1209 = vmatpush1.msra.mxu0 %v741
        %1210 = vmatprep.subr.mxu0 0.0
        %1211 = vmatpush1.msra.mxu0 %v742
        %1212 = vmatprep.subr.mxu0 0.0
        %1213 = vmatpush1.msra.mxu0 %v743
        %1214 = vmatprep.subr.mxu0 0.0
        %1215 = vmatpush1.msra.mxu0 %v744
        %1216 = vmatprep.subr.mxu0 0.0
        %1217 = vmatpush1.msra.mxu0 %v745
        %1218 = vmatprep.subr.mxu0 0.0
        %1219 = vmatpush1.msra.mxu0 %v746
        %1220 = vmatprep.subr.mxu0 0.0
        %1221 = vmatpush1.msra.mxu0 %v747
        %1222 = vmatprep.subr.mxu0 0.0
        %1223 = vmatpush1.msra.mxu0 %v748
        %1224 = vmatprep.subr.mxu0 0.0
        %1225 = vmatpush1.msra.mxu0 %v749
        %1226 = vmatprep.subr.mxu0 0.0
        %1227 = vmatpush1.msra.mxu0 %v750
        %1228 = vmatprep.subr.mxu0 0.0
        %1229 = vmatpush1.msra.mxu0 %v751
        %1230 = vmatprep.subr.mxu0 0.0
        %1231 = vmatpush1.msra.mxu0 %v752
        %1232 = vmatprep.subr.mxu0 0.0
        %1233 = vmatpush1.msra.mxu0 %v753
        %1234 = vmatprep.subr.mxu0 0.0
        %1235 = vmatpush1.msra.mxu0 %v754
        %1236 = vmatprep.subr.mxu0 0.0
        %1237 = vmatpush1.msra.mxu0 %v755
        %1238 = vmatprep.subr.mxu0 0.0
        %1239 = vmatpush1.msra.mxu0 %v756
        %1240 = vmatprep.subr.mxu0 0.0
        %1241 = vmatpush1.msra.mxu0 %v757
        %1242 = vmatprep.subr.mxu0 0.0
        %1243 = vmatpush1.msra.mxu0 %v758
        %1244 = vmatprep.subr.mxu0 0.0
        %1245 = vmatpush1.msra.mxu0 %v759
        %1246 = vmatprep.subr.mxu0 0.0
        %1247 = vmatpush1.msra.mxu0 %v760
        %1248 = vmatprep.subr.mxu0 0.0
        %1249 = vmatpush1.msra.mxu0 %v761
        %1250 = vmatprep.subr.mxu0 0.0
        %1251 = vmatpush1.msra.mxu0 %v762
        %1252 = vmatprep.subr.mxu0 0.0
        %1253 = vmatpush1.msra.mxu0 %v763
        %1254 = vmatprep.mubr.f32.mxu0 %v1097
        %1255 = vmatmul.mubr.f32.gmra.mrb[0].mxu0 %v689
        %v1256 = vpop.f32.mrb[0].mxu0
        %v1257 = vadd.f32 %v1187, %v1256
        %v1258 = vpop.f32.mrb[0].mxu0
        %1259 = vdwg.mxu0
        %1260 = vmatprep.subr.mxu0 0.0
        %1261 = vmatpush1.msra.mxu0 %v764
        %1262 = vmatprep.subr.mxu0 0.0
        %1263 = vmatpush1.msra.mxu0 %v765
        %1264 = vmatprep.subr.mxu0 0.0
        %1265 = vmatpush1.msra.mxu0 %v766
        %1266 = vmatprep.subr.mxu0 0.0
        %1267 = vmatpush1.msra.mxu0 %v767
        %1268 = vmatprep.subr.mxu0 0.0
        %1269 = vmatpush1.msra.mxu0 %v768
        %1270 = vmatprep.subr.mxu0 0.0
        %1271 = vmatpush1.msra.mxu0 %v769
        %1272 = vmatprep.subr.mxu0 0.0
        %1273 = vmatpush1.msra.mxu0 %v770
        %1274 = vmatprep.subr.mxu0 0.0
        %1275 = vmatpush1.msra.mxu0 %v771
        %1276 = vmatprep.subr.mxu0 0.0
        %1277 = vmatpush1.msra.mxu0 %v772
        %1278 = vmatprep.subr.mxu0 0.0
        %1279 = vmatpush1.msra.mxu0 %v773
        %1280 = vmatprep.subr.mxu0 0.0
        %1281 = vmatpush1.msra.mxu0 %v774
        %1282 = vmatprep.subr.mxu0 0.0
        %1283 = vmatpush1.msra.mxu0 %v775
        %1284 = vmatprep.subr.mxu0 0.0
        %1285 = vmatpush1.msra.mxu0 %v776
        %1286 = vmatprep.subr.mxu0 0.0
        %1287 = vmatpush1.msra.mxu0 %v777
        %1288 = vmatprep.subr.mxu0 0.0
        %1289 = vmatpush1.msra.mxu0 %v778
        %1290 = vmatprep.subr.mxu0 0.0
        %1291 = vmatpush1.msra.mxu0 %v779
        %1292 = vmatprep.subr.mxu0 0.0
        %1293 = vmatpush1.msra.mxu0 %v780
        %1294 = vmatprep.subr.mxu0 0.0
        %1295 = vmatpush1.msra.mxu0 %v781
        %1296 = vmatprep.subr.mxu0 0.0
        %1297 = vmatpush1.msra.mxu0 %v782
        %1298 = vmatprep.subr.mxu0 0.0
        %1299 = vmatpush1.msra.mxu0 %v783
        %1300 = vmatprep.subr.mxu0 0.0
        %1301 = vmatpush1.msra.mxu0 %v784
        %1302 = vmatprep.subr.mxu0 0.0
        %1303 = vmatpush1.msra.mxu0 %v785
        %1304 = vmatprep.subr.mxu0 0.0
        %1305 = vmatpush1.msra.mxu0 %v786
        %1306 = vmatprep.subr.mxu0 0.0
        %1307 = vmatpush1.msra.mxu0 %v787
        %1308 = vmatprep.subr.mxu0 0.0
        %1309 = vmatpush1.msra.mxu0 %v788
        %1310 = vmatprep.subr.mxu0 0.0
        %1311 = vmatpush1.msra.mxu0 %v789
        %1312 = vmatprep.subr.mxu0 0.0
        %1313 = vmatpush1.msra.mxu0 %v790
        %1314 = vmatprep.subr.mxu0 0.0
        %1315 = vmatpush1.msra.mxu0 %v791
        %1316 = vmatprep.subr.mxu0 0.0
        %1317 = vmatpush1.msra.mxu0 %v792
        %1318 = vmatprep.subr.mxu0 0.0
        %1319 = vmatpush1.msra.mxu0 %v793
        %1320 = vmatprep.subr.mxu0 0.0
        %1321 = vmatpush1.msra.mxu0 %v794
        %1322 = vmatprep.subr.mxu0 0.0
        %1323 = vmatpush1.msra.mxu0 %v795
        %1324 = vmatprep.mubr.f32.mxu0 %v1098
        %1325 = vmatmul.mubr.f32.gmra.mrb[0].mxu0 %v690
        %v1326 = vpop.f32.mrb[0].mxu0
        %v1327 = vadd.f32 %v1257, %v1326
        %v1328 = vpop.f32.mrb[0].mxu0
        %1329 = vdwg.mxu0
        %1330 = vmatprep.subr.mxu0 0.0
        %1331 = vmatpush1.msra.mxu0 %v796
        %1332 = vmatprep.subr.mxu0 0.0
        %1333 = vmatpush1.msra.mxu0 %v797
        %1334 = vmatprep.subr.mxu0 0.0
        %1335 = vmatpush1.msra.mxu0 %v798
        %1336 = vmatprep.subr.mxu0 0.0
        %1337 = vmatpush1.msra.mxu0 %v799
        %1338 = vmatprep.subr.mxu0 0.0
        %1339 = vmatpush1.msra.mxu0 %v800
        %1340 = vmatprep.subr.mxu0 0.0
        %1341 = vmatpush1.msra.mxu0 %v801
        %1342 = vmatprep.subr.mxu0 0.0
        %1343 = vmatpush1.msra.mxu0 %v802
        %1344 = vmatprep.subr.mxu0 0.0
        %1345 = vmatpush1.msra.mxu0 %v803
        %1346 = vmatprep.subr.mxu0 0.0
        %1347 = vmatpush1.msra.mxu0 %v804
        %1348 = vmatprep.subr.mxu0 0.0
        %1349 = vmatpush1.msra.mxu0 %v805
        %1350 = vmatprep.subr.mxu0 0.0
        %1351 = vmatpush1.msra.mxu0 %v806
        %1352 = vmatprep.subr.mxu0 0.0
        %1353 = vmatpush1.msra.mxu0 %v807
        %1354 = vmatprep.subr.mxu0 0.0
        %1355 = vmatpush1.msra.mxu0 %v808
        %1356 = vmatprep.subr.mxu0 0.0
        %1357 = vmatpush1.msra.mxu0 %v809
        %1358 = vmatprep.subr.mxu0 0.0
        %1359 = vmatpush1.msra.mxu0 %v810
        %1360 = vmatprep.subr.mxu0 0.0
        %1361 = vmatpush1.msra.mxu0 %v811
        %1362 = vmatprep.subr.mxu0 0.0
        %1363 = vmatpush1.msra.mxu0 %v812
        %1364 = vmatprep.subr.mxu0 0.0
        %1365 = vmatpush1.msra.mxu0 %v813
        %1366 = vmatprep.subr.mxu0 0.0
        %1367 = vmatpush1.msra.mxu0 %v814
        %1368 = vmatprep.subr.mxu0 0.0
        %1369 = vmatpush1.msra.mxu0 %v815
        %1370 = vmatprep.subr.mxu0 0.0
        %1371 = vmatpush1.msra.mxu0 %v816
        %1372 = vmatprep.subr.mxu0 0.0
        %1373 = vmatpush1.msra.mxu0 %v817
        %1374 = vmatprep.subr.mxu0 0.0
        %1375 = vmatpush1.msra.mxu0 %v818
        %1376 = vmatprep.subr.mxu0 0.0
        %1377 = vmatpush1.msra.mxu0 %v819
        %1378 = vmatprep.subr.mxu0 0.0
        %1379 = vmatpush1.msra.mxu0 %v820
        %1380 = vmatprep.subr.mxu0 0.0
        %1381 = vmatpush1.msra.mxu0 %v821
        %1382 = vmatprep.subr.mxu0 0.0
        %1383 = vmatpush1.msra.mxu0 %v822
        %1384 = vmatprep.subr.mxu0 0.0
        %1385 = vmatpush1.msra.mxu0 %v823
        %1386 = vmatprep.subr.mxu0 0.0
        %1387 = vmatpush1.msra.mxu0 %v824
        %1388 = vmatprep.subr.mxu0 0.0
        %1389 = vmatpush1.msra.mxu0 %v825
        %1390 = vmatprep.subr.mxu0 0.0
        %1391 = vmatpush1.msra.mxu0 %v826
        %1392 = vmatprep.subr.mxu0 0.0
        %1393 = vmatpush1.msra.mxu0 %v827
        %1394 = vmatprep.mubr.f32.mxu0 %v1099
        %1395 = vmatmul.mubr.f32.gmra.mrb[0].mxu0 %v691
        %v1396 = vpop.f32.mrb[0].mxu0
        %v1397 = vadd.f32 %v1327, %v1396
        %v1398 = vpop.f32.mrb[0].mxu0
        %1399 = vdwg.mxu0
        %1400 = vmatprep.subr.mxu0 0.0
        %1401 = vmatpush1.msra.mxu0 %v828
        %1402 = vmatprep.subr.mxu0 0.0
        %1403 = vmatpush1.msra.mxu0 %v829
        %1404 = vmatprep.subr.mxu0 0.0
        %1405 = vmatpush1.msra.mxu0 %v830
        %1406 = vmatprep.subr.mxu0 0.0
        %1407 = vmatpush1.msra.mxu0 %v831
        %1408 = vmatprep.subr.mxu0 0.0
        %1409 = vmatpush1.msra.mxu0 %v832
        %1410 = vmatprep.subr.mxu0 0.0
        %1411 = vmatpush1.msra.mxu0 %v833
        %1412 = vmatprep.subr.mxu0 0.0
        %1413 = vmatpush1.msra.mxu0 %v834
        %1414 = vmatprep.subr.mxu0 0.0
        %1415 = vmatpush1.msra.mxu0 %v835
        %1416 = vmatprep.subr.mxu0 0.0
        %1417 = vmatpush1.msra.mxu0 %v836
        %1418 = vmatprep.subr.mxu0 0.0
        %1419 = vmatpush1.msra.mxu0 %v837
        %1420 = vmatprep.subr.mxu0 0.0
        %1421 = vmatpush1.msra.mxu0 %v838
        %1422 = vmatprep.subr.mxu0 0.0
        %1423 = vmatpush1.msra.mxu0 %v839
        %1424 = vmatprep.subr.mxu0 0.0
        %1425 = vmatpush1.msra.mxu0 %v840
        %1426 = vmatprep.subr.mxu0 0.0
        %1427 = vmatpush1.msra.mxu0 %v841
        %1428 = vmatprep.subr.mxu0 0.0
        %1429 = vmatpush1.msra.mxu0 %v842
        %1430 = vmatprep.subr.mxu0 0.0
        %1431 = vmatpush1.msra.mxu0 %v843
        %1432 = vmatprep.subr.mxu0 0.0
        %1433 = vmatpush1.msra.mxu0 %v844
        %1434 = vmatprep.subr.mxu0 0.0
        %1435 = vmatpush1.msra.mxu0 %v845
        %1436 = vmatprep.subr.mxu0 0.0
        %1437 = vmatpush1.msra.mxu0 %v846
        %1438 = vmatprep.subr.mxu0 0.0
        %1439 = vmatpush1.msra.mxu0 %v847
        %1440 = vmatprep.subr.mxu0 0.0
        %1441 = vmatpush1.msra.mxu0 %v848
        %1442 = vmatprep.subr.mxu0 0.0
        %1443 = vmatpush1.msra.mxu0 %v849
        %1444 = vmatprep.subr.mxu0 0.0
        %1445 = vmatpush1.msra.mxu0 %v850
        %1446 = vmatprep.subr.mxu0 0.0
        %1447 = vmatpush1.msra.mxu0 %v851
        %1448 = vmatprep.subr.mxu0 0.0
        %1449 = vmatpush1.msra.mxu0 %v852
        %1450 = vmatprep.subr.mxu0 0.0
        %1451 = vmatpush1.msra.mxu0 %v853
        %1452 = vmatprep.subr.mxu0 0.0
        %1453 = vmatpush1.msra.mxu0 %v854
        %1454 = vmatprep.subr.mxu0 0.0
        %1455 = vmatpush1.msra.mxu0 %v855
        %1456 = vmatprep.subr.mxu0 0.0
        %1457 = vmatpush1.msra.mxu0 %v856
        %1458 = vmatprep.subr.mxu0 0.0
        %1459 = vmatpush1.msra.mxu0 %v857
        %1460 = vmatprep.subr.mxu0 0.0
        %1461 = vmatpush1.msra.mxu0 %v858
        %1462 = vmatprep.subr.mxu0 0.0
        %1463 = vmatpush1.msra.mxu0 %v859
        %1464 = vmatprep.mubr.f32.mxu0 %v1100
        %1465 = vmatmul.mubr.f32.gmra.mrb[0].mxu0 %v692
        %v1466 = vpop.f32.mrb[0].mxu0
        %v1467 = vadd.f32 %v1397, %v1466
        %v1468 = vpop.f32.mrb[0].mxu0
        %1469 = vdwg.mxu0
        %1470 = vmatprep.subr.mxu0 0.0
        %1471 = vmatpush1.msra.mxu0 %v860
        %1472 = vmatprep.subr.mxu0 0.0
        %1473 = vmatpush1.msra.mxu0 %v861
        %1474 = vmatprep.subr.mxu0 0.0
        %1475 = vmatpush1.msra.mxu0 %v862
        %1476 = vmatprep.subr.mxu0 0.0
        %1477 = vmatpush1.msra.mxu0 %v863
        %1478 = vmatprep.subr.mxu0 0.0
        %1479 = vmatpush1.msra.mxu0 %v864
        %1480 = vmatprep.subr.mxu0 0.0
        %1481 = vmatpush1.msra.mxu0 %v865
        %1482 = vmatprep.subr.mxu0 0.0
        %1483 = vmatpush1.msra.mxu0 %v866
        %1484 = vmatprep.subr.mxu0 0.0
        %1485 = vmatpush1.msra.mxu0 %v867
        %1486 = vmatprep.subr.mxu0 0.0
        %1487 = vmatpush1.msra.mxu0 %v868
        %1488 = vmatprep.subr.mxu0 0.0
        %1489 = vmatpush1.msra.mxu0 %v869
        %1490 = vmatprep.subr.mxu0 0.0
        %1491 = vmatpush1.msra.mxu0 %v870
        %1492 = vmatprep.subr.mxu0 0.0
        %1493 = vmatpush1.msra.mxu0 %v871
        %1494 = vmatprep.subr.mxu0 0.0
        %1495 = vmatpush1.msra.mxu0 %v872
        %1496 = vmatprep.subr.mxu0 0.0
        %1497 = vmatpush1.msra.mxu0 %v873
        %1498 = vmatprep.subr.mxu0 0.0
        %1499 = vmatpush1.msra.mxu0 %v874
        %1500 = vmatprep.subr.mxu0 0.0
        %1501 = vmatpush1.msra.mxu0 %v875
        %1502 = vmatprep.subr.mxu0 0.0
        %1503 = vmatpush1.msra.mxu0 %v876
        %1504 = vmatprep.subr.mxu0 0.0
        %1505 = vmatpush1.msra.mxu0 %v877
        %1506 = vmatprep.subr.mxu0 0.0
        %1507 = vmatpush1.msra.mxu0 %v878
        %1508 = vmatprep.subr.mxu0 0.0
        %1509 = vmatpush1.msra.mxu0 %v879
        %1510 = vmatprep.subr.mxu0 0.0
        %1511 = vmatpush1.msra.mxu0 %v880
        %1512 = vmatprep.subr.mxu0 0.0
        %1513 = vmatpush1.msra.mxu0 %v881
        %1514 = vmatprep.subr.mxu0 0.0
        %1515 = vmatpush1.msra.mxu0 %v882
        %1516 = vmatprep.subr.mxu0 0.0
        %1517 = vmatpush1.msra.mxu0 %v883
        %1518 = vmatprep.subr.mxu0 0.0
        %1519 = vmatpush1.msra.mxu0 %v884
        %1520 = vmatprep.subr.mxu0 0.0
        %1521 = vmatpush1.msra.mxu0 %v885
        %1522 = vmatprep.subr.mxu0 0.0
        %1523 = vmatpush1.msra.mxu0 %v886
        %1524 = vmatprep.subr.mxu0 0.0
        %1525 = vmatpush1.msra.mxu0 %v887
        %1526 = vmatprep.subr.mxu0 0.0
        %1527 = vmatpush1.msra.mxu0 %v888
        %1528 = vmatprep.subr.mxu0 0.0
        %1529 = vmatpush1.msra.mxu0 %v889
        %1530 = vmatprep.subr.mxu0 0.0
        %1531 = vmatpush1.msra.mxu0 %v890
        %1532 = vmatprep.subr.mxu0 0.0
        %1533 = vmatpush1.msra.mxu0 %v891
        %1534 = vmatprep.mubr.f32.mxu0 %v1101
        %1535 = vmatmul.mubr.f32.gmra.mrb[0].mxu0 %v693
        %v1536 = vpop.f32.mrb[0].mxu0
        %v1537 = vadd.f32 %v1467, %v1536
        %v1538 = vpop.f32.mrb[0].mxu0
        %1539 = vdwg.mxu0
        %1540 = vmatprep.subr.mxu0 0.0
        %1541 = vmatpush1.msra.mxu0 %v892
        %1542 = vmatprep.subr.mxu0 0.0
        %1543 = vmatpush1.msra.mxu0 %v893
        %1544 = vmatprep.subr.mxu0 0.0
        %1545 = vmatpush1.msra.mxu0 %v894
        %1546 = vmatprep.subr.mxu0 0.0
        %1547 = vmatpush1.msra.mxu0 %v895
        %1548 = vmatprep.subr.mxu0 0.0
        %1549 = vmatpush1.msra.mxu0 %v896
        %1550 = vmatprep.subr.mxu0 0.0
        %1551 = vmatpush1.msra.mxu0 %v897
        %1552 = vmatprep.subr.mxu0 0.0
        %1553 = vmatpush1.msra.mxu0 %v898
        %1554 = vmatprep.subr.mxu0 0.0
        %1555 = vmatpush1.msra.mxu0 %v899
        %1556 = vmatprep.subr.mxu0 0.0
        %1557 = vmatpush1.msra.mxu0 %v900
        %1558 = vmatprep.subr.mxu0 0.0
        %1559 = vmatpush1.msra.mxu0 %v901
        %1560 = vmatprep.subr.mxu0 0.0
        %1561 = vmatpush1.msra.mxu0 %v902
        %1562 = vmatprep.subr.mxu0 0.0
        %1563 = vmatpush1.msra.mxu0 %v903
        %1564 = vmatprep.subr.mxu0 0.0
        %1565 = vmatpush1.msra.mxu0 %v904
        %1566 = vmatprep.subr.mxu0 0.0
        %1567 = vmatpush1.msra.mxu0 %v905
        %1568 = vmatprep.subr.mxu0 0.0
        %1569 = vmatpush1.msra.mxu0 %v906
        %1570 = vmatprep.subr.mxu0 0.0
        %1571 = vmatpush1.msra.mxu0 %v907
        %1572 = vmatprep.subr.mxu0 0.0
        %1573 = vmatpush1.msra.mxu0 %v908
        %1574 = vmatprep.subr.mxu0 0.0
        %1575 = vmatpush1.msra.mxu0 %v909
        %1576 = vmatprep.subr.mxu0 0.0
        %1577 = vmatpush1.msra.mxu0 %v910
        %1578 = vmatprep.subr.mxu0 0.0
        %1579 = vmatpush1.msra.mxu0 %v911
        %1580 = vmatprep.subr.mxu0 0.0
        %1581 = vmatpush1.msra.mxu0 %v912
        %1582 = vmatprep.subr.mxu0 0.0
        %1583 = vmatpush1.msra.mxu0 %v913
        %1584 = vmatprep.subr.mxu0 0.0
        %1585 = vmatpush1.msra.mxu0 %v914
        %1586 = vmatprep.subr.mxu0 0.0
        %1587 = vmatpush1.msra.mxu0 %v915
        %1588 = vmatprep.subr.mxu0 0.0
        %1589 = vmatpush1.msra.mxu0 %v916
        %1590 = vmatprep.subr.mxu0 0.0
        %1591 = vmatpush1.msra.mxu0 %v917
        %1592 = vmatprep.subr.mxu0 0.0
        %1593 = vmatpush1.msra.mxu0 %v918
        %1594 = vmatprep.subr.mxu0 0.0
        %1595 = vmatpush1.msra.mxu0 %v919
        %1596 = vmatprep.subr.mxu0 0.0
        %1597 = vmatpush1.msra.mxu0 %v920
        %1598 = vmatprep.subr.mxu0 0.0
        %1599 = vmatpush1.msra.mxu0 %v921
        %1600 = vmatprep.subr.mxu0 0.0
        %1601 = vmatpush1.msra.mxu0 %v922
        %1602 = vmatprep.subr.mxu0 0.0
        %1603 = vmatpush1.msra.mxu0 %v923
        %1604 = vmatprep.mubr.f32.mxu0 %v1102
        %1605 = vmatmul.mubr.f32.gmra.mrb[0].mxu0 %v694
        %v1606 = vpop.f32.mrb[0].mxu0
        %v1607 = vadd.f32 %v1537, %v1606
        %v1608 = vpop.f32.mrb[0].mxu0
        %1609 = vdwg.mxu0
        %1610 = vmatprep.subr.mxu0 0.0
        %1611 = vmatpush1.msra.mxu0 %v924
        %1612 = vmatprep.subr.mxu0 0.0
        %1613 = vmatpush1.msra.mxu0 %v925
        %1614 = vmatprep.subr.mxu0 0.0
        %1615 = vmatpush1.msra.mxu0 %v926
        %1616 = vmatprep.subr.mxu0 0.0
        %1617 = vmatpush1.msra.mxu0 %v927
        %1618 = vmatprep.subr.mxu0 0.0
        %1619 = vmatpush1.msra.mxu0 %v928
        %1620 = vmatprep.subr.mxu0 0.0
        %1621 = vmatpush1.msra.mxu0 %v929
        %1622 = vmatprep.subr.mxu0 0.0
        %1623 = vmatpush1.msra.mxu0 %v930
        %1624 = vmatprep.subr.mxu0 0.0
        %1625 = vmatpush1.msra.mxu0 %v931
        %1626 = vmatprep.subr.mxu0 0.0
        %1627 = vmatpush1.msra.mxu0 %v932
        %1628 = vmatprep.subr.mxu0 0.0
        %1629 = vmatpush1.msra.mxu0 %v933
        %1630 = vmatprep.subr.mxu0 0.0
        %1631 = vmatpush1.msra.mxu0 %v934
        %1632 = vmatprep.subr.mxu0 0.0
        %1633 = vmatpush1.msra.mxu0 %v935
        %1634 = vmatprep.subr.mxu0 0.0
        %1635 = vmatpush1.msra.mxu0 %v936
        %1636 = vmatprep.subr.mxu0 0.0
        %1637 = vmatpush1.msra.mxu0 %v937
        %1638 = vmatprep.subr.mxu0 0.0
        %1639 = vmatpush1.msra.mxu0 %v938
        %1640 = vmatprep.subr.mxu0 0.0
        %1641 = vmatpush1.msra.mxu0 %v939
        %1642 = vmatprep.subr.mxu0 0.0
        %1643 = vmatpush1.msra.mxu0 %v940
        %1644 = vmatprep.subr.mxu0 0.0
        %1645 = vmatpush1.msra.mxu0 %v941
        %1646 = vmatprep.subr.mxu0 0.0
        %1647 = vmatpush1.msra.mxu0 %v942
        %1648 = vmatprep.subr.mxu0 0.0
        %1649 = vmatpush1.msra.mxu0 %v943
        %1650 = vmatprep.subr.mxu0 0.0
        %1651 = vmatpush1.msra.mxu0 %v944
        %1652 = vmatprep.subr.mxu0 0.0
        %1653 = vmatpush1.msra.mxu0 %v945
        %1654 = vmatprep.subr.mxu0 0.0
        %1655 = vmatpush1.msra.mxu0 %v946
        %1656 = vmatprep.subr.mxu0 0.0
        %1657 = vmatpush1.msra.mxu0 %v947
        %1658 = vmatprep.subr.mxu0 0.0
        %1659 = vmatpush1.msra.mxu0 %v948
        %1660 = vmatprep.subr.mxu0 0.0
        %1661 = vmatpush1.msra.mxu0 %v949
        %1662 = vmatprep.subr.mxu0 0.0
        %1663 = vmatpush1.msra.mxu0 %v950
        %1664 = vmatprep.subr.mxu0 0.0
        %1665 = vmatpush1.msra.mxu0 %v951
        %1666 = vmatprep.subr.mxu0 0.0
        %1667 = vmatpush1.msra.mxu0 %v952
        %1668 = vmatprep.subr.mxu0 0.0
        %1669 = vmatpush1.msra.mxu0 %v953
        %1670 = vmatprep.subr.mxu0 0.0
        %1671 = vmatpush1.msra.mxu0 %v954
        %1672 = vmatprep.subr.mxu0 0.0
        %1673 = vmatpush1.msra.mxu0 %v955
        %1674 = vmatprep.mubr.f32.mxu0 %v1103
        %1675 = vmatmul.mubr.f32.gmra.mrb[0].mxu0 %v695
        %v1676 = vpop.f32.mrb[0].mxu0
        %v1677 = vadd.f32 %v1607, %v1676
        %v1678 = vpop.f32.mrb[0].mxu0
        %1679 = vdwg.mxu0
        %1680 = vmatprep.subr.mxu0 0.0
        %1681 = vmatpush1.msra.mxu0 %v956
        %1682 = vmatprep.subr.mxu0 0.0
        %1683 = vmatpush1.msra.mxu0 %v957
        %1684 = vmatprep.subr.mxu0 0.0
        %1685 = vmatpush1.msra.mxu0 %v958
        %1686 = vmatprep.subr.mxu0 0.0
        %1687 = vmatpush1.msra.mxu0 %v959
        %1688 = vmatprep.subr.mxu0 0.0
        %1689 = vmatpush1.msra.mxu0 %v960
        %1690 = vmatprep.subr.mxu0 0.0
        %1691 = vmatpush1.msra.mxu0 %v961
        %1692 = vmatprep.subr.mxu0 0.0
        %1693 = vmatpush1.msra.mxu0 %v962
        %1694 = vmatprep.subr.mxu0 0.0
        %1695 = vmatpush1.msra.mxu0 %v963
        %1696 = vmatprep.subr.mxu0 0.0
        %1697 = vmatpush1.msra.mxu0 %v964
        %1698 = vmatprep.subr.mxu0 0.0
        %1699 = vmatpush1.msra.mxu0 %v965
        %1700 = vmatprep.subr.mxu0 0.0
        %1701 = vmatpush1.msra.mxu0 %v966
        %1702 = vmatprep.subr.mxu0 0.0
        %1703 = vmatpush1.msra.mxu0 %v967
        %1704 = vmatprep.subr.mxu0 0.0
        %1705 = vmatpush1.msra.mxu0 %v968
        %1706 = vmatprep.subr.mxu0 0.0
        %1707 = vmatpush1.msra.mxu0 %v969
        %1708 = vmatprep.subr.mxu0 0.0
        %1709 = vmatpush1.msra.mxu0 %v970
        %1710 = vmatprep.subr.mxu0 0.0
        %1711 = vmatpush1.msra.mxu0 %v971
        %1712 = vmatprep.subr.mxu0 0.0
        %1713 = vmatpush1.msra.mxu0 %v972
        %1714 = vmatprep.subr.mxu0 0.0
        %1715 = vmatpush1.msra.mxu0 %v973
        %1716 = vmatprep.subr.mxu0 0.0
        %1717 = vmatpush1.msra.mxu0 %v974
        %1718 = vmatprep.subr.mxu0 0.0
        %1719 = vmatpush1.msra.mxu0 %v975
        %1720 = vmatprep.subr.mxu0 0.0
        %1721 = vmatpush1.msra.mxu0 %v976
        %1722 = vmatprep.subr.mxu0 0.0
        %1723 = vmatpush1.msra.mxu0 %v977
        %1724 = vmatprep.subr.mxu0 0.0
        %1725 = vmatpush1.msra.mxu0 %v978
        %1726 = vmatprep.subr.mxu0 0.0
        %1727 = vmatpush1.msra.mxu0 %v979
        %1728 = vmatprep.subr.mxu0 0.0
        %1729 = vmatpush1.msra.mxu0 %v980
        %1730 = vmatprep.subr.mxu0 0.0
        %1731 = vmatpush1.msra.mxu0 %v981
        %1732 = vmatprep.subr.mxu0 0.0
        %1733 = vmatpush1.msra.mxu0 %v982
        %1734 = vmatprep.subr.mxu0 0.0
        %1735 = vmatpush1.msra.mxu0 %v983
        %1736 = vmatprep.subr.mxu0 0.0
        %1737 = vmatpush1.msra.mxu0 %v984
        %1738 = vmatprep.subr.mxu0 0.0
        %1739 = vmatpush1.msra.mxu0 %v985
        %1740 = vmatprep.subr.mxu0 0.0
        %1741 = vmatpush1.msra.mxu0 %v986
        %1742 = vmatprep.subr.mxu0 0.0
        %1743 = vmatpush1.msra.mxu0 %v987
        %1744 = vmatprep.mubr.f32.mxu0 %v1104
        %1745 = vmatmul.mubr.f32.gmra.mrb[0].mxu0 %v696
        %v1746 = vpop.f32.mrb[0].mxu0
        %v1747 = vadd.f32 %v1677, %v1746
        %v1748 = vpop.f32.mrb[0].mxu0
        %1749 = vdwg.mxu0
        %1750 = vmatprep.subr.mxu0 0.0
        %1751 = vmatpush1.msra.mxu0 %v988
        %1752 = vmatprep.subr.mxu0 0.0
        %1753 = vmatpush1.msra.mxu0 %v989
        %1754 = vmatprep.subr.mxu0 0.0
        %1755 = vmatpush1.msra.mxu0 %v990
        %1756 = vmatprep.subr.mxu0 0.0
        %1757 = vmatpush1.msra.mxu0 %v991
        %1758 = vmatprep.subr.mxu0 0.0
        %1759 = vmatpush1.msra.mxu0 %v992
        %1760 = vmatprep.subr.mxu0 0.0
        %1761 = vmatpush1.msra.mxu0 %v993
        %1762 = vmatprep.subr.mxu0 0.0
        %1763 = vmatpush1.msra.mxu0 %v994
        %1764 = vmatprep.subr.mxu0 0.0
        %1765 = vmatpush1.msra.mxu0 %v995
        %1766 = vmatprep.subr.mxu0 0.0
        %1767 = vmatpush1.msra.mxu0 %v996
        %1768 = vmatprep.subr.mxu0 0.0
        %1769 = vmatpush1.msra.mxu0 %v997
        %1770 = vmatprep.subr.mxu0 0.0
        %1771 = vmatpush1.msra.mxu0 %v998
        %1772 = vmatprep.subr.mxu0 0.0
        %1773 = vmatpush1.msra.mxu0 %v999
        %1774 = vmatprep.subr.mxu0 0.0
        %1775 = vmatpush1.msra.mxu0 %v1000
        %1776 = vmatprep.subr.mxu0 0.0
        %1777 = vmatpush1.msra.mxu0 %v1001
        %1778 = vmatprep.subr.mxu0 0.0
        %1779 = vmatpush1.msra.mxu0 %v1002
        %1780 = vmatprep.subr.mxu0 0.0
        %1781 = vmatpush1.msra.mxu0 %v1003
        %1782 = vmatprep.subr.mxu0 0.0
        %1783 = vmatpush1.msra.mxu0 %v1004
        %1784 = vmatprep.subr.mxu0 0.0
        %1785 = vmatpush1.msra.mxu0 %v1005
        %1786 = vmatprep.subr.mxu0 0.0
        %1787 = vmatpush1.msra.mxu0 %v1006
        %1788 = vmatprep.subr.mxu0 0.0
        %1789 = vmatpush1.msra.mxu0 %v1007
        %1790 = vmatprep.subr.mxu0 0.0
        %1791 = vmatpush1.msra.mxu0 %v1008
        %1792 = vmatprep.subr.mxu0 0.0
        %1793 = vmatpush1.msra.mxu0 %v1009
        %1794 = vmatprep.subr.mxu0 0.0
        %1795 = vmatpush1.msra.mxu0 %v1010
        %1796 = vmatprep.subr.mxu0 0.0
        %1797 = vmatpush1.msra.mxu0 %v1011
        %1798 = vmatprep.subr.mxu0 0.0
        %1799 = vmatpush1.msra.mxu0 %v1012
        %1800 = vmatprep.subr.mxu0 0.0
        %1801 = vmatpush1.msra.mxu0 %v1013
        %1802 = vmatprep.subr.mxu0 0.0
        %1803 = vmatpush1.msra.mxu0 %v1014
        %1804 = vmatprep.subr.mxu0 0.0
        %1805 = vmatpush1.msra.mxu0 %v1015
        %1806 = vmatprep.subr.mxu0 0.0
        %1807 = vmatpush1.msra.mxu0 %v1016
        %1808 = vmatprep.subr.mxu0 0.0
        %1809 = vmatpush1.msra.mxu0 %v1017
        %1810 = vmatprep.subr.mxu0 0.0
        %1811 = vmatpush1.msra.mxu0 %v1018
        %1812 = vmatprep.subr.mxu0 0.0
        %1813 = vmatpush1.msra.mxu0 %v1019
        %1814 = vmatprep.mubr.f32.mxu0 %v1105
        %1815 = vmatmul.mubr.f32.gmra.mrb[0].mxu0 %v697
        %v1816 = vpop.f32.mrb[0].mxu0
        %v1817 = vadd.f32 %v1747, %v1816
        %v1818 = vpop.f32.mrb[0].mxu0
        %1819 = vdwg.mxu0
        %1820 = vmatprep.subr.mxu0 0.0
        %1821 = vmatpush1.msra.mxu0 %v1020
        %1822 = vmatprep.subr.mxu0 0.0
        %1823 = vmatpush1.msra.mxu0 %v1021
        %1824 = vmatprep.subr.mxu0 0.0
        %1825 = vmatpush1.msra.mxu0 %v1022
        %1826 = vmatprep.subr.mxu0 0.0
        %1827 = vmatpush1.msra.mxu0 %v1023
        %1828 = vmatprep.subr.mxu0 0.0
        %1829 = vmatpush1.msra.mxu0 %v1024
        %1830 = vmatprep.subr.mxu0 0.0
        %1831 = vmatpush1.msra.mxu0 %v1025
        %1832 = vmatprep.subr.mxu0 0.0
        %1833 = vmatpush1.msra.mxu0 %v1026
        %1834 = vmatprep.subr.mxu0 0.0
        %1835 = vmatpush1.msra.mxu0 %v1027
        %1836 = vmatprep.subr.mxu0 0.0
        %1837 = vmatpush1.msra.mxu0 %v1028
        %1838 = vmatprep.subr.mxu0 0.0
        %1839 = vmatpush1.msra.mxu0 %v1029
        %1840 = vmatprep.subr.mxu0 0.0
        %1841 = vmatpush1.msra.mxu0 %v1030
        %1842 = vmatprep.subr.mxu0 0.0
        %1843 = vmatpush1.msra.mxu0 %v1031
        %1844 = vmatprep.subr.mxu0 0.0
        %1845 = vmatpush1.msra.mxu0 %v1032
        %1846 = vmatprep.subr.mxu0 0.0
        %1847 = vmatpush1.msra.mxu0 %v1033
        %1848 = vmatprep.subr.mxu0 0.0
        %1849 = vmatpush1.msra.mxu0 %v1034
        %1850 = vmatprep.subr.mxu0 0.0
        %1851 = vmatpush1.msra.mxu0 %v1035
        %1852 = vmatprep.subr.mxu0 0.0
        %1853 = vmatpush1.msra.mxu0 %v1036
        %1854 = vmatprep.subr.mxu0 0.0
        %1855 = vmatpush1.msra.mxu0 %v1037
        %1856 = vmatprep.subr.mxu0 0.0
        %1857 = vmatpush1.msra.mxu0 %v1038
        %1858 = vmatprep.subr.mxu0 0.0
        %1859 = vmatpush1.msra.mxu0 %v1039
        %1860 = vmatprep.subr.mxu0 0.0
        %1861 = vmatpush1.msra.mxu0 %v1040
        %1862 = vmatprep.subr.mxu0 0.0
        %1863 = vmatpush1.msra.mxu0 %v1041
        %1864 = vmatprep.subr.mxu0 0.0
        %1865 = vmatpush1.msra.mxu0 %v1042
        %1866 = vmatprep.subr.mxu0 0.0
        %1867 = vmatpush1.msra.mxu0 %v1043
        %1868 = vmatprep.subr.mxu0 0.0
        %1869 = vmatpush1.msra.mxu0 %v1044
        %1870 = vmatprep.subr.mxu0 0.0
        %1871 = vmatpush1.msra.mxu0 %v1045
        %1872 = vmatprep.subr.mxu0 0.0
        %1873 = vmatpush1.msra.mxu0 %v1046
        %1874 = vmatprep.subr.mxu0 0.0
        %1875 = vmatpush1.msra.mxu0 %v1047
        %1876 = vmatprep.subr.mxu0 0.0
        %1877 = vmatpush1.msra.mxu0 %v1048
        %1878 = vmatprep.subr.mxu0 0.0
        %1879 = vmatpush1.msra.mxu0 %v1049
        %1880 = vmatprep.subr.mxu0 0.0
        %1881 = vmatpush1.msra.mxu0 %v1050
        %1882 = vmatprep.subr.mxu0 0.0
        %1883 = vmatpush1.msra.mxu0 %v1051
        %1884 = vmatprep.mubr.f32.mxu0 %v1106
        %1885 = vmatmul.mubr.f32.gmra.mrb[0].mxu0 %v698
        %v1886 = vpop.f32.mrb[0].mxu0
        %v1887 = vadd.f32 %v1817, %v1886
        %v1888 = vpop.f32.mrb[0].mxu0
        %1889 = vdwg.mxu0
        %1890 = vmatprep.subr.mxu0 0.0
        %1891 = vmatpush1.msra.mxu0 %v1052
        %1892 = vmatprep.subr.mxu0 0.0
        %1893 = vmatpush1.msra.mxu0 %v1053
        %1894 = vmatprep.subr.mxu0 0.0
        %1895 = vmatpush1.msra.mxu0 %v1054
        %1896 = vmatprep.subr.mxu0 0.0
        %1897 = vmatpush1.msra.mxu0 %v1055
        %1898 = vmatprep.subr.mxu0 0.0
        %1899 = vmatpush1.msra.mxu0 %v1056
        %1900 = vmatprep.subr.mxu0 0.0
        %1901 = vmatpush1.msra.mxu0 %v1057
        %1902 = vmatprep.subr.mxu0 0.0
        %1903 = vmatpush1.msra.mxu0 %v1058
        %1904 = vmatprep.subr.mxu0 0.0
        %1905 = vmatpush1.msra.mxu0 %v1059
        %1906 = vmatprep.subr.mxu0 0.0
        %1907 = vmatpush1.msra.mxu0 %v1060
        %1908 = vmatprep.subr.mxu0 0.0
        %1909 = vmatpush1.msra.mxu0 %v1061
        %1910 = vmatprep.subr.mxu0 0.0
        %1911 = vmatpush1.msra.mxu0 %v1062
        %1912 = vmatprep.subr.mxu0 0.0
        %1913 = vmatpush1.msra.mxu0 %v1063
        %1914 = vmatprep.subr.mxu0 0.0
        %1915 = vmatpush1.msra.mxu0 %v1064
        %1916 = vmatprep.subr.mxu0 0.0
        %1917 = vmatpush1.msra.mxu0 %v1065
        %1918 = vmatprep.subr.mxu0 0.0
        %1919 = vmatpush1.msra.mxu0 %v1066
        %1920 = vmatprep.subr.mxu0 0.0
        %1921 = vmatpush1.msra.mxu0 %v1067
        %1922 = vmatprep.subr.mxu0 0.0
        %1923 = vmatpush1.msra.mxu0 %v1068
        %1924 = vmatprep.subr.mxu0 0.0
        %1925 = vmatpush1.msra.mxu0 %v1069
        %1926 = vmatprep.subr.mxu0 0.0
        %1927 = vmatpush1.msra.mxu0 %v1070
        %1928 = vmatprep.subr.mxu0 0.0
        %1929 = vmatpush1.msra.mxu0 %v1071
        %1930 = vmatprep.subr.mxu0 0.0
        %1931 = vmatpush1.msra.mxu0 %v1072
        %1932 = vmatprep.subr.mxu0 0.0
        %1933 = vmatpush1.msra.mxu0 %v1073
        %1934 = vmatprep.subr.mxu0 0.0
        %1935 = vmatpush1.msra.mxu0 %v1074
        %1936 = vmatprep.subr.mxu0 0.0
        %1937 = vmatpush1.msra.mxu0 %v1075
        %1938 = vmatprep.subr.mxu0 0.0
        %1939 = vmatpush1.msra.mxu0 %v1076
        %1940 = vmatprep.subr.mxu0 0.0
        %1941 = vmatpush1.msra.mxu0 %v1077
        %1942 = vmatprep.subr.mxu0 0.0
        %1943 = vmatpush1.msra.mxu0 %v1078
        %1944 = vmatprep.subr.mxu0 0.0
        %1945 = vmatpush1.msra.mxu0 %v1079
        %1946 = vmatprep.subr.mxu0 0.0
        %1947 = vmatpush1.msra.mxu0 %v1080
        %1948 = vmatprep.subr.mxu0 0.0
        %1949 = vmatpush1.msra.mxu0 %v1081
        %1950 = vmatprep.subr.mxu0 0.0
        %1951 = vmatpush1.msra.mxu0 %v1082
        %1952 = vmatprep.subr.mxu0 0.0
        %1953 = vmatpush1.msra.mxu0 %v1083
        %1954 = vmatprep.mubr.f32.mxu0 %v1107
        %1955 = vmatmul.mubr.f32.gmra.mrb[0].mxu0 %v699
        %v1956 = vpop.f32.mrb[0].mxu0
        %v1957 = vadd.f32 %v1887, %v1956
        %v1958 = vpop.f32.mrb[0].mxu0
        %1959 = vdwg.mxu0
        %v1960 = vld [vmem:[#allocation9] sm:$0x1]
        %v1962 = vrot.slane %v1957, 7
        %vm1964 = vcmask 1040384
        %v1965 = vsel %vm1964, %v1960, %v1962
        %v1966 = vld [vmem:[#allocation10] sm:$0x1f]
        %v1967 = vadd.f32 %v1965, %v1966
        %v1968 = vld [vmem:[#allocation12] sm:$0x1]
        %v1969 = vld [vmem:[#allocation13] sm:$0x1]
        %vm1970 = vcmask 1044480
        %v1971 = vsel %vm1970, %v1967, 0.0
        %1972 = vadd.xlane.f32.xlu0 %v1971
        %v1973 = vpop.xlane.xlu0 %1972
        %v1974 = vrcp.pop 128.0
        %v1975 = vmul.f32 %v1973, %v1974
        %v1976 = vsub.f32 %v1967, %v1975
        %v1977 = vmul.f32 %v1976, %v1976
        %v1978 = vsel %vm1970, %v1977, 0.0
        %1979 = vadd.xlane.f32.xlu0 %v1978
        %v1980 = vpop.xlane.xlu0 %1979
        %v1981 = vmul.f32 %v1980, %v1974
        %v1982 = vadd.f32 %v1981, 1e-05
        %v1983 = vrsqrt.pop %v1982
        %v1984 = vmul.f32 %v1976, %v1983
        %v1986 = vlaneseq
        %v1987 = vshrl.u32 %v1986, 7
        %v1988 = vsub.s32 0, %v1987
        %v1989 = vrot.slane %v1968, %v1988
        %v1991 = vmul.f32 %v1984, %v1989
        %v1993 = vlaneseq
        %v1994 = vshrl.u32 %v1993, 7
        %v1995 = vsub.s32 0, %v1994
        %v1996 = vrot.slane %v1969, %v1995
        %v1998 = vadd.f32 %v1991, %v1996
        %1999 = vst [vmem:[%s411] sm:$0x1f] %v1998
        %p2000 = scmp.lt.s32.totalorder %s26, 1
        %s2001 = scalar_select %p2000, %s26, 1
        %s2002 = smul.addr %s2001, 8
        %s2003 = scalar_lea.vmem %s8, %s2002
        // Predicated region
        $region85: #{tpu_custom_call.1} parent=51 // pred_check
          %p2004 = pneg %p217
        $region86: #{tpu_custom_call.1} parent=51 // pred_check_branch
          %2006 = sbr.rel (%p2004) target = $region88
        $region87: #{tpu_custom_call.1} parent=51 // pred_region
          _
        $region88: #{tpu_custom_call.1} parent=51 // pred_fallthru
          _
      $region52: #{tpu_custom_call.1} parent=5 // pred_fallthru
        _
      %p2007 = scmp.le.s32.totalorder 2, %s21
      // Predicated region
      $region89: #{tpu_custom_call.1} parent=5 // pred_check
        %p2008 = pneg %p2007
      $region90: #{tpu_custom_call.1} parent=5 // pred_check_branch
        %2010 = sbr.rel (%p2008) target = $region92
      $region91: #{tpu_custom_call.1} parent=5 // pred_region
        %s2011 = ssub.s32 %s21, 2
        // Predicated region
        $region93: #{tpu_custom_call.1} parent=91 // pred_check
          %p2012 = pneg %p223
        $region94: #{tpu_custom_call.1} parent=91 // pred_check_branch
          %2014 = sbr.rel (%p2012) target = $region96
        $region95: #{tpu_custom_call.1} parent=91 // pred_region
          %p2015 = scmp.lt.s32.totalorder %s27, 1
          %s2016 = scalar_select %p2015, %s27, 1
          %s2017 = smul.addr %s2016, 8
          %s2018 = scalar_lea.vmem %s8, %s2017
        $region96: #{tpu_custom_call.1} parent=91 // pred_fallthru
          _
      $region92: #{tpu_custom_call.1} parent=5 // pred_fallthru
        _
    $region6: #{tpu_custom_call.1} parent=1 // loop_footer
      %s25 = sadd.s32 1, %s21
    $region7: #{tpu_custom_call.1} parent=1 // loop_footer_branch
      %20 = sbr.rel target = $region3
    $region8: #{tpu_custom_call.1} parent=1 // loop_exit
      _
    %2019 = vsyncpa [#allocation3], 1
    %s2020 = scalar_lea.sflag [#allocation3], 1
    %2021 = vsyncpa %s2020, 1
    %2022 = vsyncpa [#allocation5], 1
    %2023 = vsyncpa [#allocation8], 1
    %2024 = vsyncpa [#allocation11], 1
    %2025 = vsyncpa [#allocation14], 1

</llo_original>
